<compile_context>
chip_gen: v7x
topology: tpu7x:2x2x1
jax: 0.10.0
libtpu: 0.0.40
codegen_flags: <defaults>
</compile_context>

<pallas_src>
import math
import functools

import jax
import jax.numpy as jnp
from jax import lax
from jax.experimental import pallas as pl
from jax.experimental.pallas import tpu as pltpu


# Contract dim 0 of both operands:  (C, T) x (C, N) -> (T, N)   (i.e. lhs^T @ rhs)
_DN_CONTRACT_DIM0 = (((0,), (0,)), ((), ()))


def _pred_kernel(cls_feat_ref, reg_feat_ref,
                 cls_w_ref, cls_b_ref, reg_w_ref, reg_b_ref,
                 anchors_ref,
                 cls_out_ref, reg_out_ref, box_out_ref,
                 *, stride: float):
    # cls_feat_ref / reg_feat_ref: (C_in, TILE_HW) channel-major slabs.
    # Fused: 1x1 conv (MXU) + bias add + box decode (exp on EUP) in one pass.
    cls = lax.dot_general(
        cls_feat_ref[...], cls_w_ref[...], _DN_CONTRACT_DIM0,
        preferred_element_type=jnp.float32) + cls_b_ref[...]
    reg = lax.dot_general(
        reg_feat_ref[...], reg_w_ref[...], _DN_CONTRACT_DIM0,
        preferred_element_type=jnp.float32) + reg_b_ref[...]

    cls_out_ref[...] = cls.astype(cls_out_ref.dtype)
    reg_out_ref[...] = reg.astype(reg_out_ref.dtype)

    anchors = anchors_ref[...]                      # (TILE_HW, 2)
    ctr = reg[:, :2] * stride + anchors             # center decode
    wh = jnp.exp(reg[:, 2:]) * stride               # width / height decode
    box = jnp.concatenate([ctr - 0.5 * wh, ctr + 0.5 * wh], axis=-1)
    box_out_ref[...] = box.astype(box_out_ref.dtype)


def _pick_spatial_tile(hw: int) -> int:
    """Large, lane-dense spatial tile; cdiv grid, no whole-array fallback."""
    if hw % 128 == 0:
        for cand in (512, 384, 256, 128):
            if hw % cand == 0:
                return cand
        return 128
    if hw <= 2048:
        # Full-extent lane block (exempt from the 128-multiple rule); small.
        return hw
    # Large, non-128-aligned HW: tile at 512, tail block handled by Pallas
    # boundary padding (OOB reads only affect discarded tail rows).
    return 512


class SingleLevelPredLayerPallas:
    def __init__(self, cls_dim=256, reg_dim=256, stride=32,
                 num_classes=80, num_coords=4, key=None):
        self.stride = stride
        self.cls_dim = cls_dim
        self.reg_dim = reg_dim
        self.num_classes = num_classes
        self.num_coords = num_coords

        if key is None:
            key = jax.random.PRNGKey(0)
        k1, k2 = jax.random.split(key)

        # Deterministic weight init (approx. PyTorch kaiming-uniform scale for
        # a 1x1 conv: bound = 1/sqrt(fan_in)).  Stored as (C_in, C_out).
        cls_bound = 1.0 / math.sqrt(cls_dim)
        reg_bound = 1.0 / math.sqrt(reg_dim)
        self.cls_w = jax.random.uniform(k1, (cls_dim, num_classes),
                                        jnp.float32, -cls_bound, cls_bound)
        self.reg_w = jax.random.uniform(k2, (reg_dim, num_coords),
                                        jnp.float32, -reg_bound, reg_bound)

        # Bias init exactly as in init_bias().
        cls_bias_val = math.log(5.0 / num_classes / (640.0 / stride) ** 2)
        self.cls_b = jnp.full((1, num_classes), cls_bias_val, jnp.float32)
        self.reg_b = jnp.full((1, num_coords), 1.0, jnp.float32)

    def generate_anchors(self, fmp_size):
        fmp_h, fmp_w = fmp_size
        ay, ax = jnp.meshgrid(jnp.arange(fmp_h), jnp.arange(fmp_w), indexing="ij")
        anchors = jnp.stack([ax, ay], axis=-1).astype(jnp.float32).reshape(-1, 2)
        anchors = (anchors + 0.5) * self.stride
        return anchors  # (H*W, 2)

    def __call__(self, cls_feat, reg_feat):
        # cls_feat / reg_feat: NCHW float32, as in the PyTorch module.
        B, _, H, W = cls_feat.shape
        HW = H * W
        NC = self.num_classes
        NR = self.num_coords

        # Free reshapes (contiguous dim collapse) — no HBM transpose pass.
        cls_cm = cls_feat.reshape(B, self.cls_dim, HW)
        reg_cm = reg_feat.reshape(B, self.reg_dim, HW)

        anchors = self.generate_anchors([H, W])          # (HW, 2)

        tile_hw = _pick_spatial_tile(HW)
        n_t = pl.cdiv(HW, tile_hw)
        grid = (B, n_t)

        kernel = functools.partial(_pred_kernel, stride=float(self.stride))

        out_shapes = (
            jax.ShapeDtypeStruct((B, HW, NC), jnp.float32),   # pred_cls
            jax.ShapeDtypeStruct((B, HW, NR), jnp.float32),   # pred_reg
            jax.ShapeDtypeStruct((B, HW, 4), jnp.float32),    # pred_box
        )
        in_specs = [
            pl.BlockSpec((None, self.cls_dim, tile_hw), lambda b, t: (b, 0, t)),
            pl.BlockSpec((None, self.reg_dim, tile_hw), lambda b, t: (b, 0, t)),
            pl.BlockSpec((self.cls_dim, NC), lambda b, t: (0, 0)),
            pl.BlockSpec((1, NC), lambda b, t: (0, 0)),
            pl.BlockSpec((self.reg_dim, NR), lambda b, t: (0, 0)),
            pl.BlockSpec((1, NR), lambda b, t: (0, 0)),
            pl.BlockSpec((tile_hw, 2), lambda b, t: (t, 0)),   # batch-independent
        ]
        out_specs = (
            pl.BlockSpec((None, tile_hw, NC), lambda b, t: (b, t, 0)),
            pl.BlockSpec((None, tile_hw, NR), lambda b, t: (b, t, 0)),
            pl.BlockSpec((None, tile_hw, 4), lambda b, t: (b, t, 0)),
        )

        pred_cls, pred_reg, pred_box = pl.pallas_call(
            kernel,
            out_shape=out_shapes,
            grid_spec=pltpu.PrefetchScalarGridSpec(
                num_scalar_prefetch=0,
                grid=grid,
                in_specs=in_specs,
                out_specs=out_specs,
            ),
            compiler_params=pltpu.CompilerParams(
                dimension_semantics=("parallel", "parallel")),
        )(cls_cm, reg_cm, self.cls_w, self.cls_b,
          self.reg_w, self.reg_b, anchors)

        stride_tensor = jnp.ones_like(anchors[..., :1]) * self.stride

        return {
            "pred_cls": pred_cls,        # (B, H*W, num_classes)
            "pred_reg": pred_reg,        # (B, H*W, 4)
            "pred_box": pred_box,        # (B, H*W, 4)
            "anchors": anchors,          # (H*W, 2)
            "stride": self.stride,
            "stride_tensors": stride_tensor,   # (H*W, 1)
        }


def _reference(layer, cls_feat, reg_feat):
    """Pure-JAX reference mirroring the PyTorch forward (f32, highest precision)."""
    B, _, H, W = cls_feat.shape
    HW = H * W
    cls_rows = jnp.transpose(cls_feat, (0, 2, 3, 1)).reshape(B, HW, layer.cls_dim)
    reg_rows = jnp.transpose(reg_feat, (0, 2, 3, 1)).reshape(B, HW, layer.reg_dim)
    hp = jax.lax.Precision.HIGHEST
    cls_pred = jnp.matmul(cls_rows, layer.cls_w, precision=hp) + layer.cls_b
    reg_pred = jnp.matmul(reg_rows, layer.reg_w, precision=hp) + layer.reg_b
    anchors = layer.generate_anchors([H, W])
    ctr = reg_pred[..., :2] * layer.stride + anchors[None, :, :]
    wh = jnp.exp(reg_pred[..., 2:]) * layer.stride
    box = jnp.concatenate([ctr - 0.5 * wh, ctr + 0.5 * wh], axis=-1)
    return cls_pred, reg_pred, box


if __name__ == "__main__":
    key = jax.random.PRNGKey(0)
    k_layer, k_cls, k_reg = jax.random.split(key, 3)

    B, C_in, H, W = 2, 64, 16, 16          # small shapes; HW = 256 (lane-aligned)
    num_classes, stride = 80, 32

    layer = SingleLevelPredLayerPallas(cls_dim=C_in, reg_dim=C_in, stride=stride,
                                       num_classes=num_classes, num_coords=4,
                                       key=k_layer)

    cls_feat = jax.random.normal(k_cls, (B, C_in, H, W), jnp.float32)
    reg_feat = jax.random.normal(k_reg, (B, C_in, H, W), jnp.float32)

    outputs = layer(cls_feat, reg_feat)
    jax.block_until_ready(outputs["pred_box"])

    # Sanity check vs. pure-JAX reference.
    ref_cls, ref_reg, ref_box = _reference(layer, cls_feat, reg_feat)
    assert jnp.allclose(outputs["pred_cls"], ref_cls, atol=5e-3, rtol=5e-3)
    assert jnp.allclose(outputs["pred_reg"], ref_reg, atol=5e-3, rtol=5e-3)
    assert jnp.allclose(outputs["pred_box"], ref_box, atol=5e-2, rtol=5e-3)
    assert outputs["pred_cls"].shape == (B, H * W, num_classes)
    assert outputs["pred_reg"].shape == (B, H * W, 4)
    assert outputs["pred_box"].shape == (B, H * W, 4)
    assert outputs["anchors"].shape == (H * W, 2)
    assert outputs["stride_tensors"].shape == (H * W, 1)

    print("KERNEL_OK")
</pallas_src>

<mosaic_0001>
module attributes {stable_mosaic.version = 11 : i64} {
  func.func @_pred_kernel(%arg0: i32, %arg1: i32, %arg2: memref<1x64x256xf32, #tpu.memory_space<vmem>>, %arg3: memref<1x64x256xf32, #tpu.memory_space<vmem>>, %arg4: memref<64x80xf32, #tpu.memory_space<vmem>>, %arg5: memref<1x80xf32, #tpu.memory_space<vmem>>, %arg6: memref<64x4xf32, #tpu.memory_space<vmem>>, %arg7: memref<1x4xf32, #tpu.memory_space<vmem>>, %arg8: memref<256x2xf32, #tpu.memory_space<vmem>>, %arg9: memref<1x256x80xf32, #tpu.memory_space<vmem>>, %arg10: memref<1x256x4xf32, #tpu.memory_space<vmem>>, %arg11: memref<1x256x4xf32, #tpu.memory_space<vmem>>) attributes {dimension_semantics = [#tpu.dimension_semantics<parallel>, #tpu.dimension_semantics<parallel>], iteration_bounds = array<i64: 2, 1>, scalar_prefetch = 0 : i64, scratch_operands = 0 : i64, tpu.core_type = #tpu.core_type<tc>, window_params = [{transform_indices = @transform_0, window_bounds = array<i64: 1, 64, 256>}, {transform_indices = @transform_1, window_bounds = array<i64: 1, 64, 256>}, {pipeline_mode = #tpu.pipeline_mode<synchronous>, transform_indices = @transform_2, window_bounds = array<i64: 64, 80>}, {pipeline_mode = #tpu.pipeline_mode<synchronous>, transform_indices = @transform_3, window_bounds = array<i64: 1, 80>}, {pipeline_mode = #tpu.pipeline_mode<synchronous>, transform_indices = @transform_4, window_bounds = array<i64: 64, 4>}, {pipeline_mode = #tpu.pipeline_mode<synchronous>, transform_indices = @transform_5, window_bounds = array<i64: 1, 4>}, {transform_indices = @transform_6, window_bounds = array<i64: 256, 2>}, {transform_indices = @transform_7, window_bounds = array<i64: 1, 256, 80>}, {transform_indices = @transform_8, window_bounds = array<i64: 1, 256, 4>}, {transform_indices = @transform_9, window_bounds = array<i64: 1, 256, 4>}]} {
    %c0 = arith.constant 0 : index
    %c0_0 = arith.constant 0 : index
    %c0_1 = arith.constant 0 : index
    %0 = vector.load %arg2[%c0, %c0_0, %c0_1] : memref<1x64x256xf32, #tpu.memory_space<vmem>>, vector<1x64x256xf32>
    %1 = vector.shape_cast %0 : vector<1x64x256xf32> to vector<64x256xf32>
    %c0_2 = arith.constant 0 : index
    %c0_3 = arith.constant 0 : index
    %2 = vector.load %arg4[%c0_2, %c0_3] : memref<64x80xf32, #tpu.memory_space<vmem>>, vector<64x80xf32>
    %cst = arith.constant dense<0.000000e+00> : vector<256x80xf32>
    %3 = tpu.matmul %1, %2, %cst {dimension_numbers = #tpu.dot_dimension_numbers<[0], [0], [1], [1], [0, 1, 1, 1], [], []>} : vector<64x256xf32>, vector<64x80xf32>, vector<256x80xf32> -> vector<256x80xf32>
    %c0_4 = arith.constant 0 : index
    %c0_5 = arith.constant 0 : index
    %4 = vector.load %arg5[%c0_4, %c0_5] : memref<1x80xf32, #tpu.memory_space<vmem>>, vector<1x80xf32>
    %5 = vector.broadcast %4 : vector<1x80xf32> to vector<256x80xf32>
    %6 = arith.addf %3, %5 : vector<256x80xf32>
    %c0_6 = arith.constant 0 : index
    %c0_7 = arith.constant 0 : index
    %c0_8 = arith.constant 0 : index
    %7 = vector.load %arg3[%c0_6, %c0_7, %c0_8] : memref<1x64x256xf32, #tpu.memory_space<vmem>>, vector<1x64x256xf32>
    %8 = vector.shape_cast %7 : vector<1x64x256xf32> to vector<64x256xf32>
    %c0_9 = arith.constant 0 : index
    %c0_10 = arith.constant 0 : index
    %9 = vector.load %arg6[%c0_9, %c0_10] : memref<64x4xf32, #tpu.memory_space<vmem>>, vector<64x4xf32>
    %cst_11 = arith.constant dense<0.000000e+00> : vector<256x4xf32>
    %10 = tpu.matmul %8, %9, %cst_11 {dimension_numbers = #tpu.dot_dimension_numbers<[0], [0], [1], [1], [0, 1, 1, 1], [], []>} : vector<64x256xf32>, vector<64x4xf32>, vector<256x4xf32> -> vector<256x4xf32>
    %c0_12 = arith.constant 0 : index
    %c0_13 = arith.constant 0 : index
    %11 = vector.load %arg7[%c0_12, %c0_13] : memref<1x4xf32, #tpu.memory_space<vmem>>, vector<1x4xf32>
    %12 = vector.broadcast %11 : vector<1x4xf32> to vector<256x4xf32>
    %13 = arith.addf %10, %12 : vector<256x4xf32>
    %c0_14 = arith.constant 0 : index
    %c0_15 = arith.constant 0 : index
    %c0_16 = arith.constant 0 : index
    %14 = vector.load %arg9[%c0_14, %c0_15, %c0_16] : memref<1x256x80xf32, #tpu.memory_space<vmem>>, vector<1x256x80xf32>
    %15 = vector.shape_cast %14 : vector<1x256x80xf32> to vector<256x80xf32>
    %16 = vector.shape_cast %6 : vector<256x80xf32> to vector<1x256x80xf32>
    tpu.vector_store %arg9[%c0_14, %c0_15, %c0_16], %16 {strides = array<i32>} : memref<1x256x80xf32, #tpu.memory_space<vmem>>, vector<1x256x80xf32>,
    %c0_17 = arith.constant 0 : index
    %c0_18 = arith.constant 0 : index
    %c0_19 = arith.constant 0 : index
    %17 = vector.load %arg10[%c0_17, %c0_18, %c0_19] : memref<1x256x4xf32, #tpu.memory_space<vmem>>, vector<1x256x4xf32>
    %18 = vector.shape_cast %17 : vector<1x256x4xf32> to vector<256x4xf32>
    %19 = vector.shape_cast %13 : vector<256x4xf32> to vector<1x256x4xf32>
    tpu.vector_store %arg10[%c0_17, %c0_18, %c0_19], %19 {strides = array<i32>} : memref<1x256x4xf32, #tpu.memory_space<vmem>>, vector<1x256x4xf32>,
    %c0_20 = arith.constant 0 : index
    %c0_21 = arith.constant 0 : index
    %20 = vector.load %arg8[%c0_20, %c0_21] : memref<256x2xf32, #tpu.memory_space<vmem>>, vector<256x2xf32>
    %21 = vector.extract_strided_slice %13 {offsets = [0, 0], sizes = [256, 2], strides = [1, 1]} : vector<256x4xf32> to vector<256x2xf32>
    %cst_22 = arith.constant 3.200000e+01 : f32
    %22 = vector.broadcast %cst_22 : f32 to vector<256x2xf32>
    %23 = arith.mulf %21, %22 : vector<256x2xf32>
    %24 = arith.addf %23, %20 : vector<256x2xf32>
    %25 = vector.extract_strided_slice %13 {offsets = [0, 2], sizes = [256, 2], strides = [1, 1]} : vector<256x4xf32> to vector<256x2xf32>
    %26 = math.exp %25 : vector<256x2xf32>
    %cst_23 = arith.constant 3.200000e+01 : f32
    %27 = vector.broadcast %cst_23 : f32 to vector<256x2xf32>
    %28 = arith.mulf %26, %27 : vector<256x2xf32>
    %cst_24 = arith.constant 5.000000e-01 : f32
    %29 = vector.broadcast %cst_24 : f32 to vector<256x2xf32>
    %30 = arith.mulf %29, %28 : vector<256x2xf32>
    %31 = arith.subf %24, %30 : vector<256x2xf32>
    %cst_25 = arith.constant 5.000000e-01 : f32
    %32 = vector.broadcast %cst_25 : f32 to vector<256x2xf32>
    %33 = arith.mulf %32, %28 : vector<256x2xf32>
    %34 = arith.addf %24, %33 : vector<256x2xf32>
    %35 = tpu.concatenate %31, %34 in 1 : vector<256x2xf32>, vector<256x2xf32> -> vector<256x4xf32>
    %c0_26 = arith.constant 0 : index
    %c0_27 = arith.constant 0 : index
    %c0_28 = arith.constant 0 : index
    %36 = vector.load %arg11[%c0_26, %c0_27, %c0_28] : memref<1x256x4xf32, #tpu.memory_space<vmem>>, vector<1x256x4xf32>
    %37 = vector.shape_cast %36 : vector<1x256x4xf32> to vector<256x4xf32>
    %38 = vector.shape_cast %35 : vector<256x4xf32> to vector<1x256x4xf32>
    tpu.vector_store %arg11[%c0_26, %c0_27, %c0_28], %38 {strides = array<i32>} : memref<1x256x4xf32, #tpu.memory_space<vmem>>, vector<1x256x4xf32>,
    return
  }
  func.func @transform_0(%arg0: i32, %arg1: i32) -> (i32, i32, i32) {
    %c0_i32 = arith.constant 0 : i32
    %c0_i32_0 = arith.constant 0 : i32
    return %arg0, %c0_i32, %arg1 : i32, i32, i32
  }
  func.func @transform_1(%arg0: i32, %arg1: i32) -> (i32, i32, i32) {
    %c0_i32 = arith.constant 0 : i32
    %c0_i32_0 = arith.constant 0 : i32
    return %arg0, %c0_i32, %arg1 : i32, i32, i32
  }
  func.func @transform_2(%arg0: i32, %arg1: i32) -> (i32, i32) {
    %c0_i32 = arith.constant 0 : i32
    %c0_i32_0 = arith.constant 0 : i32
    %c0_i32_1 = arith.constant 0 : i32
    return %c0_i32, %c0_i32_0 : i32, i32
  }
  func.func @transform_3(%arg0: i32, %arg1: i32) -> (i32, i32) {
    %c0_i32 = arith.constant 0 : i32
    %c0_i32_0 = arith.constant 0 : i32
    %c0_i32_1 = arith.constant 0 : i32
    return %c0_i32, %c0_i32_0 : i32, i32
  }
  func.func @transform_4(%arg0: i32, %arg1: i32) -> (i32, i32) {
    %c0_i32 = arith.constant 0 : i32
    %c0_i32_0 = arith.constant 0 : i32
    %c0_i32_1 = arith.constant 0 : i32
    return %c0_i32, %c0_i32_0 : i32, i32
  }
  func.func @transform_5(%arg0: i32, %arg1: i32) -> (i32, i32) {
    %c0_i32 = arith.constant 0 : i32
    %c0_i32_0 = arith.constant 0 : i32
    %c0_i32_1 = arith.constant 0 : i32
    return %c0_i32, %c0_i32_0 : i32, i32
  }
  func.func @transform_6(%arg0: i32, %arg1: i32) -> (i32, i32) {
    %c0_i32 = arith.constant 0 : i32
    %c0_i32_0 = arith.constant 0 : i32
    return %arg1, %c0_i32 : i32, i32
  }
  func.func @transform_7(%arg0: i32, %arg1: i32) -> (i32, i32, i32) {
    %c0_i32 = arith.constant 0 : i32
    %c0_i32_0 = arith.constant 0 : i32
    return %arg0, %arg1, %c0_i32 : i32, i32, i32
  }
  func.func @transform_8(%arg0: i32, %arg1: i32) -> (i32, i32, i32) {
    %c0_i32 = arith.constant 0 : i32
    %c0_i32_0 = arith.constant 0 : i32
    return %arg0, %arg1, %c0_i32 : i32, i32, i32
  }
  func.func @transform_9(%arg0: i32, %arg1: i32) -> (i32, i32, i32) {
    %c0_i32 = arith.constant 0 : i32
    %c0_i32_0 = arith.constant 0 : i32
    return %arg0, %arg1, %c0_i32 : i32, i32, i32
  }
}

</mosaic_0001>

<llo_original>
// kernel: tpu_custom_call.1
$region0: #{tpu_custom_call.1}
  #allocation0 [shape = 'u32[]', space=smem, size = 0x4, offset = 0x4, fixed_abs, tag = 'smem constant byte address 0x4 - core index']
  #allocation1 [shape = 'u32[144,128]{1,0:T(1,128)}', space=vmem, size = 0x12000, scoped, tag = 'internal scratch']
  %s0 = inlined_call_operand.vmem [shape: f32[2,64,256], index: 0, kind: input, shape index: {}]
  %s1 = inlined_call_operand.hbm [shape: f32[2,64,256], index: 1, kind: input, shape index: {}]
  %s2 = inlined_call_operand.vmem [shape: f32[64,80], index: 2, kind: input, shape index: {}]
  %s3 = inlined_call_operand.vmem [shape: f32[1,80], index: 3, kind: input, shape index: {}]
  %s4 = inlined_call_operand.vmem [shape: f32[64,4], index: 4, kind: input, shape index: {}]
  %s5 = inlined_call_operand.vmem [shape: f32[1,4], index: 5, kind: input, shape index: {}]
  %s6 = inlined_call_operand.vmem [shape: f32[256,2], index: 6, kind: input, shape index: {}]
  %s7 = inlined_call_operand.vmem [shape: f32[2,256,80], index: 7, kind: output, shape index: {0}]
  %s8 = inlined_call_operand.vmem [shape: f32[2,256,4], index: 8, kind: output, shape index: {1}]
  %s9 = inlined_call_operand.vmem [shape: f32[2,256,4], index: 9, kind: output, shape index: {2}]
  %10 = xla_tuple %s7, %s8, %s9
  %s11 = sld [smem:[#allocation0]]
  $region81: #{tpu_custom_call.1} parent=0
    _
  %s13 = ssub.s32 1, %s11
  %s14 = scalar_select 0, %s13, %s11
  $region1: #{tpu_custom_call.1} parent=0
    #allocation2 [shape = 'u8[131072]{0}', space=vmem, size = 0x20000, scoped, tag = 'input window, operand 1']
    #allocation3 [shape = 's32[2]{0}', space=sflag, size = 0x8, scoped, tag = 'scoped memory for tpu_custom_call.1']
    %15 = vsyncpa [#allocation3], 0
    %s16 = scalar_lea.sflag [#allocation3], 1
    %17 = vsyncpa %s16, 0
    loop: start=0, step=1, limit=4
    $region2: #{tpu_custom_call.1} parent=1 // loop_pre_header
      _
    $region3: #{tpu_custom_call.1} parent=1 // loop_header
      %s19 = sphi 0, %s23
      %p20 = scmp.ge.s32.totalorder %s19, 4
      %s26 = sphi 0, %s38
      %s27 = sphi 0, %s34
      %s28 = sphi 0, %s26
      %s29 = sphi 0, %s27
      %s30 = sphi 0, %s28
      %s31 = sphi 0, %s29
      %s43 = sphi 0, %s45
      %s46 = sphi 0, %s43
      %s47 = sphi 0, %s46
      %s63 = sphi 0, %s47
      %s71 = sphi 0, %s73
      %s74 = sphi 0, %s71
      %s75 = sphi 0, %s74
      %s91 = sphi 0, %s75
      %s95 = sphi 0, %s95
      %s97 = sphi 0, %s95
      %s98 = sphi 0, %s97
      %s112 = sphi 0, %s98
      %s116 = sphi 0, %s116
      %s118 = sphi 0, %s116
      %s119 = sphi 0, %s118
      %s133 = sphi 0, %s119
      %s137 = sphi 0, %s137
      %s139 = sphi 0, %s137
      %s140 = sphi 0, %s139
      %s154 = sphi 0, %s140
      %s158 = sphi 0, %s158
      %s160 = sphi 0, %s158
      %s161 = sphi 0, %s160
      %s175 = sphi 0, %s161
      %s181 = sphi 0, %s183
      %s184 = sphi 0, %s181
      %s185 = sphi 0, %s184
      %s201 = sphi 0, %s185
      %s209 = sphi 0, %s211
      %s212 = sphi 0, %s209
      %s213 = sphi 0, %s212
      %s229 = sphi 0, %s213
      %s237 = sphi 0, %s239
      %s240 = sphi 0, %s237
      %s241 = sphi 0, %s240
      %s257 = sphi 0, %s241
      %s265 = sphi 0, %s267
      %s268 = sphi 0, %s265
      %s269 = sphi 0, %s268
      %s285 = sphi 0, %s269
    $region4: #{tpu_custom_call.1} parent=1 // loop_header_branch
      %22 = sbr.rel (%p20) target = $region8
    $region5: #{tpu_custom_call.1} parent=1 // loop_body
      %s24 = ssub.s32 %s19, 1
      %s25 = ssub.s32 %s19, 2
      %s32 = sadd.s32 1, %s27
      %p33 = scmp.ge.s32.totalorder %s32, 1
      %s34 = scalar_select %p33, 0, %s32
      %s35 = sadd.s32 1, %s26
      %s36 = scalar_select %p33, %s35, %s26
      %p37 = scmp.ge.s32.totalorder %s36, 2
      %s38 = scalar_select %p37, 0, %s36
      %s39 = ssub.s32 %s26, %s38
      %s40 = ssub.s32 %s27, %s34
      %s41 = sor.u32 %s39, %s40
      %p42 = scmp.eq.s32.totalorder %s41, 0
      %s44 = sadd.s32 %s43, 1
      %s45 = scalar_select %p42, %s43, %s44
      %p48 = pneg %p42
      %p49 = scmp.eq.s32.totalorder %s19, 1
      %p50 = por %p48, %p49
      %p51 = scmp.ne.s32.totalorder %s43, %s46
      %p52 = scmp.eq.s32.totalorder %s19, 0
      %p53 = por %p51, %p52
      %p54 = scmp.ne.s32.totalorder %s43, %s46
      %p55 = scmp.eq.s32.totalorder %s24, 1
      %p56 = por %p54, %p55
      %p57 = scmp.ne.s32.totalorder %s46, %s47
      %p58 = scmp.eq.s32.totalorder %s24, 0
      %p59 = por %p57, %p58
      %p60 = scmp.ne.s32.totalorder %s46, %s47
      %p61 = scmp.eq.s32.totalorder %s25, 1
      %p62 = por %p60, %p61
      %p64 = scmp.ne.s32.totalorder %s47, %s63
      %p65 = scmp.eq.s32.totalorder %s25, 0
      %p66 = por %p64, %p65
      %s67 = ssub.s32 %s26, %s38
      %s68 = ssub.s32 %s27, %s34
      %s69 = sor.u32 %s67, %s68
      %p70 = scmp.eq.s32.totalorder %s69, 0
      %s72 = sadd.s32 %s71, 1
      %s73 = scalar_select %p70, %s71, %s72
      %p76 = pneg %p70
      %p77 = scmp.eq.s32.totalorder %s19, 1
      %p78 = por %p76, %p77
      %p79 = scmp.ne.s32.totalorder %s71, %s74
      %p80 = scmp.eq.s32.totalorder %s19, 0
      %p81 = por %p79, %p80
      %p82 = scmp.ne.s32.totalorder %s71, %s74
      %p83 = scmp.eq.s32.totalorder %s24, 1
      %p84 = por %p82, %p83
      %p85 = scmp.ne.s32.totalorder %s74, %s75
      %p86 = scmp.eq.s32.totalorder %s24, 0
      %p87 = por %p85, %p86
      %p88 = scmp.ne.s32.totalorder %s74, %s75
      %p89 = scmp.eq.s32.totalorder %s25, 1
      %p90 = por %p88, %p89
      %p92 = scmp.ne.s32.totalorder %s75, %s91
      %p93 = scmp.eq.s32.totalorder %s25, 0
      %p94 = por %p92, %p93
      %s96 = sadd.s32 %s95, 1
      %p99 = scmp.eq.s32.totalorder %s19, 1
      %p100 = scmp.ne.s32.totalorder %s95, %s97
      %p101 = scmp.eq.s32.totalorder %s19, 0
      %p102 = por %p100, %p101
      %p103 = scmp.ne.s32.totalorder %s95, %s97
      %p104 = scmp.eq.s32.totalorder %s24, 1
      %p105 = por %p103, %p104
      %p106 = scmp.ne.s32.totalorder %s97, %s98
      %p107 = scmp.eq.s32.totalorder %s24, 0
      %p108 = por %p106, %p107
      %p109 = scmp.ne.s32.totalorder %s97, %s98
      %p110 = scmp.eq.s32.totalorder %s25, 1
      %p111 = por %p109, %p110
      %p113 = scmp.ne.s32.totalorder %s98, %s112
      %p114 = scmp.eq.s32.totalorder %s25, 0
      %p115 = por %p113, %p114
      %s117 = sadd.s32 %s116, 1
      %p120 = scmp.eq.s32.totalorder %s19, 1
      %p121 = scmp.ne.s32.totalorder %s116, %s118
      %p122 = scmp.eq.s32.totalorder %s19, 0
      %p123 = por %p121, %p122
      %p124 = scmp.ne.s32.totalorder %s116, %s118
      %p125 = scmp.eq.s32.totalorder %s24, 1
      %p126 = por %p124, %p125
      %p127 = scmp.ne.s32.totalorder %s118, %s119
      %p128 = scmp.eq.s32.totalorder %s24, 0
      %p129 = por %p127, %p128
      %p130 = scmp.ne.s32.totalorder %s118, %s119
      %p131 = scmp.eq.s32.totalorder %s25, 1
      %p132 = por %p130, %p131
      %p134 = scmp.ne.s32.totalorder %s119, %s133
      %p135 = scmp.eq.s32.totalorder %s25, 0
      %p136 = por %p134, %p135
      %s138 = sadd.s32 %s137, 1
      %p141 = scmp.eq.s32.totalorder %s19, 1
      %p142 = scmp.ne.s32.totalorder %s137, %s139
      %p143 = scmp.eq.s32.totalorder %s19, 0
      %p144 = por %p142, %p143
      %p145 = scmp.ne.s32.totalorder %s137, %s139
      %p146 = scmp.eq.s32.totalorder %s24, 1
      %p147 = por %p145, %p146
      %p148 = scmp.ne.s32.totalorder %s139, %s140
      %p149 = scmp.eq.s32.totalorder %s24, 0
      %p150 = por %p148, %p149
      %p151 = scmp.ne.s32.totalorder %s139, %s140
      %p152 = scmp.eq.s32.totalorder %s25, 1
      %p153 = por %p151, %p152
      %p155 = scmp.ne.s32.totalorder %s140, %s154
      %p156 = scmp.eq.s32.totalorder %s25, 0
      %p157 = por %p155, %p156
      %s159 = sadd.s32 %s158, 1
      %p162 = scmp.eq.s32.totalorder %s19, 1
      %p163 = scmp.ne.s32.totalorder %s158, %s160
      %p164 = scmp.eq.s32.totalorder %s19, 0
      %p165 = por %p163, %p164
      %p166 = scmp.ne.s32.totalorder %s158, %s160
      %p167 = scmp.eq.s32.totalorder %s24, 1
      %p168 = por %p166, %p167
      %p169 = scmp.ne.s32.totalorder %s160, %s161
      %p170 = scmp.eq.s32.totalorder %s24, 0
      %p171 = por %p169, %p170
      %p172 = scmp.ne.s32.totalorder %s160, %s161
      %p173 = scmp.eq.s32.totalorder %s25, 1
      %p174 = por %p172, %p173
      %p176 = scmp.ne.s32.totalorder %s161, %s175
      %p177 = scmp.eq.s32.totalorder %s25, 0
      %p178 = por %p176, %p177
      %s179 = ssub.s32 %s27, %s34
      %p180 = scmp.eq.s32.totalorder %s179, 0
      %s182 = sadd.s32 %s181, 1
      %s183 = scalar_select %p180, %s181, %s182
      %p186 = pneg %p180
      %p187 = scmp.eq.s32.totalorder %s19, 1
      %p188 = por %p186, %p187
      %p189 = scmp.ne.s32.totalorder %s181, %s184
      %p190 = scmp.eq.s32.totalorder %s19, 0
      %p191 = por %p189, %p190
      %p192 = scmp.ne.s32.totalorder %s181, %s184
      %p193 = scmp.eq.s32.totalorder %s24, 1
      %p194 = por %p192, %p193
      %p195 = scmp.ne.s32.totalorder %s184, %s185
      %p196 = scmp.eq.s32.totalorder %s24, 0
      %p197 = por %p195, %p196
      %p198 = scmp.ne.s32.totalorder %s184, %s185
      %p199 = scmp.eq.s32.totalorder %s25, 1
      %p200 = por %p198, %p199
      %p202 = scmp.ne.s32.totalorder %s185, %s201
      %p203 = scmp.eq.s32.totalorder %s25, 0
      %p204 = por %p202, %p203
      %s205 = ssub.s32 %s26, %s38
      %s206 = ssub.s32 %s27, %s34
      %s207 = sor.u32 %s205, %s206
      %p208 = scmp.eq.s32.totalorder %s207, 0
      %s210 = sadd.s32 %s209, 1
      %s211 = scalar_select %p208, %s209, %s210
      %p214 = pneg %p208
      %p215 = scmp.eq.s32.totalorder %s19, 1
      %p216 = por %p214, %p215
      %p217 = scmp.ne.s32.totalorder %s209, %s212
      %p218 = scmp.eq.s32.totalorder %s19, 0
      %p219 = por %p217, %p218
      %p220 = scmp.ne.s32.totalorder %s209, %s212
      %p221 = scmp.eq.s32.totalorder %s24, 1
      %p222 = por %p220, %p221
      %p223 = scmp.ne.s32.totalorder %s212, %s213
      %p224 = scmp.eq.s32.totalorder %s24, 0
      %p225 = por %p223, %p224
      %p226 = scmp.ne.s32.totalorder %s212, %s213
      %p227 = scmp.eq.s32.totalorder %s25, 1
      %p228 = por %p226, %p227
      %p230 = scmp.ne.s32.totalorder %s213, %s229
      %p231 = scmp.eq.s32.totalorder %s25, 0
      %p232 = por %p230, %p231
      %s233 = ssub.s32 %s26, %s38
      %s234 = ssub.s32 %s27, %s34
      %s235 = sor.u32 %s233, %s234
      %p236 = scmp.eq.s32.totalorder %s235, 0
      %s238 = sadd.s32 %s237, 1
      %s239 = scalar_select %p236, %s237, %s238
      %p242 = pneg %p236
      %p243 = scmp.eq.s32.totalorder %s19, 1
      %p244 = por %p242, %p243
      %p245 = scmp.ne.s32.totalorder %s237, %s240
      %p246 = scmp.eq.s32.totalorder %s19, 0
      %p247 = por %p245, %p246
      %p248 = scmp.ne.s32.totalorder %s237, %s240
      %p249 = scmp.eq.s32.totalorder %s24, 1
      %p250 = por %p248, %p249
      %p251 = scmp.ne.s32.totalorder %s240, %s241
      %p252 = scmp.eq.s32.totalorder %s24, 0
      %p253 = por %p251, %p252
      %p254 = scmp.ne.s32.totalorder %s240, %s241
      %p255 = scmp.eq.s32.totalorder %s25, 1
      %p256 = por %p254, %p255
      %p258 = scmp.ne.s32.totalorder %s241, %s257
      %p259 = scmp.eq.s32.totalorder %s25, 0
      %p260 = por %p258, %p259
      %s261 = ssub.s32 %s26, %s38
      %s262 = ssub.s32 %s27, %s34
      %s263 = sor.u32 %s261, %s262
      %p264 = scmp.eq.s32.totalorder %s263, 0
      %s266 = sadd.s32 %s265, 1
      %s267 = scalar_select %p264, %s265, %s266
      %p270 = pneg %p264
      %p271 = scmp.eq.s32.totalorder %s19, 1
      %p272 = por %p270, %p271
      %p273 = scmp.ne.s32.totalorder %s265, %s268
      %p274 = scmp.eq.s32.totalorder %s19, 0
      %p275 = por %p273, %p274
      %p276 = scmp.ne.s32.totalorder %s265, %s268
      %p277 = scmp.eq.s32.totalorder %s24, 1
      %p278 = por %p276, %p277
      %p279 = scmp.ne.s32.totalorder %s268, %s269
      %p280 = scmp.eq.s32.totalorder %s24, 0
      %p281 = por %p279, %p280
      %p282 = scmp.ne.s32.totalorder %s268, %s269
      %p283 = scmp.eq.s32.totalorder %s25, 1
      %p284 = por %p282, %p283
      %p286 = scmp.ne.s32.totalorder %s269, %s285
      %p287 = scmp.eq.s32.totalorder %s25, 0
      %p288 = por %p286, %p287
      %p289 = scmp.le.s32.totalorder 1, %s19
      %p290 = scmp.lt.s32.totalorder %s19, 3
      %p291 = pnand %p289, %p290
      %p292 = pneg %p291
      // Predicated region
      $region9: #{tpu_custom_call.1} parent=5 // pred_check
        _
      $region10: #{tpu_custom_call.1} parent=5 // pred_check_branch
        %294 = sbr.rel (%p291) target = $region12
      $region11: #{tpu_custom_call.1} parent=5 // pred_region
        %s295 = ssub.s32 %s19, 1
        // Predicated region
        $region13: #{tpu_custom_call.1} parent=11 // pred_check
          %p296 = pneg %p108
        $region14: #{tpu_custom_call.1} parent=11 // pred_check_branch
          %298 = sbr.rel (%p296) target = $region16
        $region15: #{tpu_custom_call.1} parent=11 // pred_region
          _
        $region16: #{tpu_custom_call.1} parent=11 // pred_fallthru
          _
        // Predicated region
        $region17: #{tpu_custom_call.1} parent=11 // pred_check
          %p299 = pneg %p129
        $region18: #{tpu_custom_call.1} parent=11 // pred_check_branch
          %301 = sbr.rel (%p299) target = $region20
        $region19: #{tpu_custom_call.1} parent=11 // pred_region
          _
        $region20: #{tpu_custom_call.1} parent=11 // pred_fallthru
          _
        // Predicated region
        $region21: #{tpu_custom_call.1} parent=11 // pred_check
          %p302 = pneg %p150
        $region22: #{tpu_custom_call.1} parent=11 // pred_check_branch
          %304 = sbr.rel (%p302) target = $region24
        $region23: #{tpu_custom_call.1} parent=11 // pred_region
          _
        $region24: #{tpu_custom_call.1} parent=11 // pred_fallthru
          _
        // Predicated region
        $region25: #{tpu_custom_call.1} parent=11 // pred_check
          %p305 = pneg %p171
        $region26: #{tpu_custom_call.1} parent=11 // pred_check_branch
          %307 = sbr.rel (%p305) target = $region28
        $region27: #{tpu_custom_call.1} parent=11 // pred_region
          _
        $region28: #{tpu_custom_call.1} parent=11 // pred_fallthru
          _
        // Predicated region
        $region29: #{tpu_custom_call.1} parent=11 // pred_check
          %p308 = pneg %p197
        $region30: #{tpu_custom_call.1} parent=11 // pred_check_branch
          %310 = sbr.rel (%p308) target = $region32
        $region31: #{tpu_custom_call.1} parent=11 // pred_region
          %s311 = smul.u32 32, %s29
          %p312 = scmp.lt.s32.totalorder %s311, 31
          %s313 = scalar_select %p312, %s311, 31
          %s314 = smul.addr %s313, 8
          %s315 = scalar_lea.vmem %s6, %s314
          %s316 = smul.u32 32, %s29
        $region32: #{tpu_custom_call.1} parent=11 // pred_fallthru
          _
      $region12: #{tpu_custom_call.1} parent=5 // pred_fallthru
        _
      %p317 = scmp.lt.s32.totalorder %s19, 2
      // Predicated region
      $region33: #{tpu_custom_call.1} parent=5 // pred_check
        %p318 = pneg %p317
      $region34: #{tpu_custom_call.1} parent=5 // pred_check_branch
        %320 = sbr.rel (%p318) target = $region36
      $region35: #{tpu_custom_call.1} parent=5 // pred_region
        // Predicated region
        $region37: #{tpu_custom_call.1} parent=35 // pred_check
          %p321 = pneg %p53
        $region38: #{tpu_custom_call.1} parent=35 // pred_check_branch
          %323 = sbr.rel (%p321) target = $region40
        $region39: #{tpu_custom_call.1} parent=35 // pred_region
          %s324 = smul.u32 2, %s27
          %p325 = scmp.lt.s32.totalorder %s26, 1
          %s326 = scalar_select %p325, %s26, 1
          %p327 = scmp.lt.s32.totalorder %s324, 1
          %s328 = scalar_select %p327, %s324, 1
          %s329 = smul.addr %s326, 16
          %s330 = sadd.s32 %s328, %s329
          %s331 = smul.addr %s330, 8
          %s332 = scalar_lea.vmem %s0, %s331
          %s333 = smul.u32 2, %s27
        $region40: #{tpu_custom_call.1} parent=35 // pred_fallthru
          _
        // Predicated region
        $region41: #{tpu_custom_call.1} parent=35 // pred_check
          %p334 = pneg %p81
        $region42: #{tpu_custom_call.1} parent=35 // pred_check_branch
          %336 = sbr.rel (%p334) target = $region44
        $region43: #{tpu_custom_call.1} parent=35 // pred_region
          %s337 = sand.u32 %s71, 1
          %s338 = scalar_lea.sflag [#allocation3], %s337
          %s339 = sand.u32 %s71, 1
          %s340 = smul.addr %s339, 128
          %s341 = scalar_lea.vmem [#allocation2], %s340
          %s342 = smul.u32 2, %s27
          %s344 = ssub.s32 2048, 2048
          %345 = vsyncadd %s338, %s344
          %s346 = smul.addr %s26, 16
          %s347 = sadd.s32 %s342, %s346
          %s348 = smul.addr %s347, 128
          %s349 = scalar_lea.hbm %s1, %s348
          %s350 = sshll.u32 %s341, 4
          %s351 = int_to_ptr.vmem [resolvable:$true] %s350
          %356 = dma.hbm_to_vmem [thread:$0]  %s349, 2048, %s351, %s338, 256, 256, 16
        $region44: #{tpu_custom_call.1} parent=35 // pred_fallthru
          _
      $region36: #{tpu_custom_call.1} parent=5 // pred_fallthru
        _
      %p357 = scmp.le.s32.totalorder 1, %s19
      %p358 = scmp.lt.s32.totalorder %s19, 3
      %p359 = pnand %p357, %p358
      %p360 = pneg %p359
      // Predicated region
      $region45: #{tpu_custom_call.1} parent=5 // pred_check
        _
      $region46: #{tpu_custom_call.1} parent=5 // pred_check_branch
        %362 = sbr.rel (%p359) target = $region48
      $region47: #{tpu_custom_call.1} parent=5 // pred_region
        %s363 = ssub.s32 %s19, 1
        %s364 = sand.u32 %s74, 1
        %s365 = scalar_lea.sflag [#allocation3], %s364
        %s366 = sand.u32 %s74, 1
        %s367 = smul.addr %s366, 128
        %s368 = scalar_lea.vmem [#allocation2], %s367
        // Predicated region
        $region49: #{tpu_custom_call.1} parent=47 // pred_check
          %p369 = pneg %p87
        $region50: #{tpu_custom_call.1} parent=47 // pred_check_branch
          %371 = sbr.rel (%p369) target = $region52
        $region51: #{tpu_custom_call.1} parent=47 // pred_region
          %372 = dma.done %s365, 2048
        $region52: #{tpu_custom_call.1} parent=47 // pred_fallthru
          _
        %s373 = smul.u32 2, %s29
        %p374 = scmp.lt.s32.totalorder %s28, 1
        %s375 = scalar_select %p374, %s28, 1
        %p376 = scmp.lt.s32.totalorder %s373, 1
        %s377 = scalar_select %p376, %s373, 1
        %s378 = smul.addr %s375, 16
        %s379 = sadd.s32 %s377, %s378
        %s380 = smul.addr %s379, 8
        %s381 = scalar_lea.vmem %s0, %s380
        %p382 = pneg %p59
        %p383 = pneg %p56
        %s384 = sand.u32 %s74, 1
        %s385 = scalar_lea.sflag [#allocation3], %s384
        %s386 = sand.u32 %s74, 1
        %s387 = smul.addr %s386, 128
        %s388 = scalar_lea.vmem [#allocation2], %s387
        %p389 = pneg %p87
        %p390 = pneg %p84
        %p391 = pneg %p108
        %p392 = pneg %p105
        %p393 = pneg %p129
        %p394 = pneg %p126
        %p395 = pneg %p150
        %p396 = pneg %p147
        %p397 = pneg %p171
        %p398 = pneg %p168
        %s399 = smul.u32 32, %s29
        %p400 = scmp.lt.s32.totalorder %s399, 31
        %s401 = scalar_select %p400, %s399, 31
        %s402 = smul.addr %s401, 8
        %s403 = scalar_lea.vmem %s6, %s402
        %p404 = pneg %p197
        %p405 = pneg %p194
        %p406 = pneg %p225
        %p407 = pneg %p222
        %s408 = smul.u32 32, %s29
        %p409 = scmp.lt.s32.totalorder %s28, 1
        %s410 = scalar_select %p409, %s28, 1
        %p411 = scmp.lt.s32.totalorder %s408, 31
        %s412 = scalar_select %p411, %s408, 31
        %s413 = smul.addr %s410, 32
        %s414 = sadd.s32 %s412, %s413
        %s415 = smul.addr %s414, 8
        %s416 = scalar_lea.vmem %s7, %s415
        %p417 = pneg %p253
        %p418 = pneg %p250
        %s419 = smul.u32 32, %s29
        %p420 = scmp.lt.s32.totalorder %s28, 1
        %s421 = scalar_select %p420, %s28, 1
        %p422 = scmp.lt.s32.totalorder %s419, 31
        %s423 = scalar_select %p422, %s419, 31
        %s424 = smul.addr %s421, 32
        %s425 = sadd.s32 %s423, %s424
        %s426 = smul.addr %s425, 8
        %s427 = scalar_lea.vmem %s8, %s426
        %p428 = pneg %p281
        %p429 = pneg %p278
        %s430 = smul.u32 32, %s29
        %p431 = scmp.lt.s32.totalorder %s28, 1
        %s432 = scalar_select %p431, %s28, 1
        %p433 = scmp.lt.s32.totalorder %s430, 31
        %s434 = scalar_select %p433, %s430, 31
        %s435 = smul.addr %s432, 32
        %s436 = sadd.s32 %s434, %s435
        %s437 = smul.addr %s436, 8
        %s438 = scalar_lea.vmem %s9, %s437
        %s439 = smul.u32 2, %s29
        %p440 = scmp.lt.s32.totalorder %s28, 1
        %s441 = scalar_select %p440, %s28, 1
        %p442 = scmp.lt.s32.totalorder %s439, 1
        %s443 = scalar_select %p442, %s439, 1
        %s444 = smul.addr %s441, 16
        %s445 = sadd.s32 %s443, %s444
        %s446 = smul.addr %s445, 8
        %s447 = scalar_lea.vmem %s0, %s446
        %s448 = smul.u32 2, %s29
        %s449 = smul.u32 2, %s29
        %s450 = smul.u32 32, %s29
        %p451 = scmp.lt.s32.totalorder %s450, 31
        %s452 = scalar_select %p451, %s450, 31
        %s453 = smul.addr %s452, 8
        %s454 = scalar_lea.vmem %s6, %s453
        %s455 = smul.u32 32, %s29
        %s456 = smul.u32 32, %s29
        %p457 = scmp.lt.s32.totalorder %s28, 1
        %s458 = scalar_select %p457, %s28, 1
        %p459 = scmp.lt.s32.totalorder %s456, 31
        %s460 = scalar_select %p459, %s456, 31
        %s461 = smul.addr %s458, 32
        %s462 = sadd.s32 %s460, %s461
        %s463 = smul.addr %s462, 8
        %s464 = scalar_lea.vmem %s7, %s463
        %s465 = smul.u32 32, %s29
        %s466 = smul.u32 32, %s29
        %p467 = scmp.lt.s32.totalorder %s28, 1
        %s468 = scalar_select %p467, %s28, 1
        %p469 = scmp.lt.s32.totalorder %s466, 31
        %s470 = scalar_select %p469, %s466, 31
        %s471 = smul.addr %s468, 32
        %s472 = sadd.s32 %s470, %s471
        %s473 = smul.addr %s472, 8
        %s474 = scalar_lea.vmem %s8, %s473
        %s475 = smul.u32 32, %s29
        %s476 = smul.u32 32, %s29
        %p477 = scmp.lt.s32.totalorder %s28, 1
        %s478 = scalar_select %p477, %s28, 1
        %p479 = scmp.lt.s32.totalorder %s476, 31
        %s480 = scalar_select %p479, %s476, 31
        %s481 = smul.addr %s478, 32
        %s482 = sadd.s32 %s480, %s481
        %s483 = smul.addr %s482, 8
        %s484 = scalar_lea.vmem %s9, %s483
        %s485 = smul.u32 32, %s29
        %v486 = vld [vmem:[%s447] sm:$0xff]
        %v487 = vld [vmem:[%s447 + $0x8] sm:$0xff]
        %v488 = vld [vmem:[%s447 + $0x10] sm:$0xff]
        %v489 = vld [vmem:[%s447 + $0x18] sm:$0xff]
        %v490 = vld [vmem:[%s447 + $0x20] sm:$0xff]
        %v491 = vld [vmem:[%s447 + $0x28] sm:$0xff]
        %v492 = vld [vmem:[%s447 + $0x30] sm:$0xff]
        %v493 = vld [vmem:[%s447 + $0x38] sm:$0xff]
        %v494 = vld [vmem:[%s447 + $0x40] sm:$0xff]
        %v495 = vld [vmem:[%s447 + $0x48] sm:$0xff]
        %v496 = vld [vmem:[%s447 + $0x50] sm:$0xff]
        %v497 = vld [vmem:[%s447 + $0x58] sm:$0xff]
        %v498 = vld [vmem:[%s447 + $0x60] sm:$0xff]
        %v499 = vld [vmem:[%s447 + $0x68] sm:$0xff]
        %v500 = vld [vmem:[%s447 + $0x70] sm:$0xff]
        %v501 = vld [vmem:[%s447 + $0x78] sm:$0xff]
        %v502 = vld [vmem:[%s2] sm:$0xff]
        %v503 = vld [vmem:[%s2 + $0x8] sm:$0xff]
        %v504 = vld [vmem:[%s2 + $0x10] sm:$0xff]
        %v505 = vld [vmem:[%s2 + $0x18] sm:$0xff]
        %v506 = vld [vmem:[%s2 + $0x20] sm:$0xff]
        %v507 = vld [vmem:[%s2 + $0x28] sm:$0xff]
        %v508 = vld [vmem:[%s2 + $0x30] sm:$0xff]
        %v509 = vld [vmem:[%s2 + $0x38] sm:$0xff]
        %v510 = vld [vmem:[%s3] sm:$0x1]
        %v512 = vlaneseq
        %v513 = vshrl.u32 %v512, 7
        %v514 = vsub.s32 0, %v513
        %v515 = vrot.slane %v510, %v514
        %517 = vxpose.xlu0.b32.start [1/16] %v486, 128
        %518 = vxpose.xlu0.b32.cont [2/16] %v488, 128
        %519 = vxpose.xlu0.b32.cont [3/16] %v490, 128
        %520 = vxpose.xlu0.b32.cont [4/16] %v492, 128
        %521 = vxpose.xlu0.b32.cont [5/16] %v494, 128
        %522 = vxpose.xlu0.b32.cont [6/16] %v496, 128
        %523 = vxpose.xlu0.b32.cont [7/16] %v498, 128
        %524 = vxpose.xlu0.b32.cont [8/16] %v500, 128
        %525 = vxpose.xlu0.b32.cont [9/16] 0.0, 128
        %526 = vxpose.xlu0.b32.cont [10/16] 0.0, 128
        %527 = vxpose.xlu0.b32.cont [11/16] 0.0, 128
        %528 = vxpose.xlu0.b32.cont [12/16] 0.0, 128
        %529 = vxpose.xlu0.b32.cont [13/16] 0.0, 128
        %530 = vxpose.xlu0.b32.cont [14/16] 0.0, 128
        %531 = vxpose.xlu0.b32.cont [15/16] 0.0, 128
        %532 = vxpose.xlu0.b32.end [16/16] 0.0, 128
        %v533 = vpop.trf.xlu0
        %v534 = vpop.trf.xlu0
        %v535 = vpop.trf.xlu0
        %v536 = vpop.trf.xlu0
        %v537 = vpop.trf.xlu0
        %v538 = vpop.trf.xlu0
        %v539 = vpop.trf.xlu0
        %v540 = vpop.trf.xlu0
        %v541 = vpop.trf.xlu0
        %v542 = vpop.trf.xlu0
        %v543 = vpop.trf.xlu0
        %v544 = vpop.trf.xlu0
        %v545 = vpop.trf.xlu0
        %v546 = vpop.trf.xlu0
        %v547 = vpop.trf.xlu0
        %v548 = vpop.trf.xlu0
        %549 = vxpose.xlu0.b32.start [1/16] %v487, 128
        %550 = vxpose.xlu0.b32.cont [2/16] %v489, 128
        %551 = vxpose.xlu0.b32.cont [3/16] %v491, 128
        %552 = vxpose.xlu0.b32.cont [4/16] %v493, 128
        %553 = vxpose.xlu0.b32.cont [5/16] %v495, 128
        %554 = vxpose.xlu0.b32.cont [6/16] %v497, 128
        %555 = vxpose.xlu0.b32.cont [7/16] %v499, 128
        %556 = vxpose.xlu0.b32.cont [8/16] %v501, 128
        %557 = vxpose.xlu0.b32.cont [9/16] 0.0, 128
        %558 = vxpose.xlu0.b32.cont [10/16] 0.0, 128
        %559 = vxpose.xlu0.b32.cont [11/16] 0.0, 128
        %560 = vxpose.xlu0.b32.cont [12/16] 0.0, 128
        %561 = vxpose.xlu0.b32.cont [13/16] 0.0, 128
        %562 = vxpose.xlu0.b32.cont [14/16] 0.0, 128
        %563 = vxpose.xlu0.b32.cont [15/16] 0.0, 128
        %564 = vxpose.xlu0.b32.end [16/16] 0.0, 128
        %v565 = vpop.trf.xlu0
        %v566 = vpop.trf.xlu0
        %v567 = vpop.trf.xlu0
        %v568 = vpop.trf.xlu0
        %v569 = vpop.trf.xlu0
        %v570 = vpop.trf.xlu0
        %v571 = vpop.trf.xlu0
        %v572 = vpop.trf.xlu0
        %v573 = vpop.trf.xlu0
        %v574 = vpop.trf.xlu0
        %v575 = vpop.trf.xlu0
        %v576 = vpop.trf.xlu0
        %v577 = vpop.trf.xlu0
        %v578 = vpop.trf.xlu0
        %v579 = vpop.trf.xlu0
        %v580 = vpop.trf.xlu0
        %vm581 = vcmask 523264
        %v583 = vsel %vm581, %v533, 0
        %v586 = vsel %vm581, %v534, 0
        %v589 = vsel %vm581, %v535, 0
        %v592 = vsel %vm581, %v536, 0
        %v595 = vsel %vm581, %v537, 0
        %v598 = vsel %vm581, %v538, 0
        %v601 = vsel %vm581, %v539, 0
        %v604 = vsel %vm581, %v540, 0
        %v607 = vsel %vm581, %v541, 0
        %v610 = vsel %vm581, %v542, 0
        %v613 = vsel %vm581, %v543, 0
        %v616 = vsel %vm581, %v544, 0
        %v619 = vsel %vm581, %v545, 0
        %v622 = vsel %vm581, %v546, 0
        %v625 = vsel %vm581, %v547, 0
        %v628 = vsel %vm581, %v548, 0
        %v631 = vsel %vm581, %v565, 0
        %v634 = vsel %vm581, %v566, 0
        %v637 = vsel %vm581, %v567, 0
        %v640 = vsel %vm581, %v568, 0
        %v643 = vsel %vm581, %v569, 0
        %v646 = vsel %vm581, %v570, 0
        %v649 = vsel %vm581, %v571, 0
        %v652 = vsel %vm581, %v572, 0
        %v655 = vsel %vm581, %v573, 0
        %v658 = vsel %vm581, %v574, 0
        %v661 = vsel %vm581, %v575, 0
        %v664 = vsel %vm581, %v576, 0
        %v667 = vsel %vm581, %v577, 0
        %v670 = vsel %vm581, %v578, 0
        %v673 = vsel %vm581, %v579, 0
        %v676 = vsel %vm581, %v580, 0
        %678 = vmatprep.subr.mxu0 0.0
        %679 = vmatpush1.msra.mxu0 %v502
        %680 = vmatprep.subr.mxu0 0.0
        %681 = vmatpush1.msra.mxu0 %v503
        %682 = vmatprep.subr.mxu0 0.0
        %683 = vmatpush1.msra.mxu0 %v504
        %684 = vmatprep.subr.mxu0 0.0
        %685 = vmatpush1.msra.mxu0 %v505
        %686 = vmatprep.subr.mxu0 0.0
        %687 = vmatpush1.msra.mxu0 %v506
        %688 = vmatprep.subr.mxu0 0.0
        %689 = vmatpush1.msra.mxu0 %v507
        %690 = vmatprep.subr.mxu0 0.0
        %691 = vmatpush1.msra.mxu0 %v508
        %692 = vmatprep.subr.mxu0 0.0
        %693 = vmatpush1.msra.mxu0 %v509
        %694 = vmatprep.subr.mxu0 0.0
        %695 = vmatpush1.msra.mxu0 0.0
        %696 = vmatprep.subr.mxu0 0.0
        %697 = vmatpush1.msra.mxu0 0.0
        %698 = vmatprep.subr.mxu0 0.0
        %699 = vmatpush1.msra.mxu0 0.0
        %700 = vmatprep.subr.mxu0 0.0
        %701 = vmatpush1.msra.mxu0 0.0
        %702 = vmatprep.subr.mxu0 0.0
        %703 = vmatpush1.msra.mxu0 0.0
        %704 = vmatprep.subr.mxu0 0.0
        %705 = vmatpush1.msra.mxu0 0.0
        %706 = vmatprep.subr.mxu0 0.0
        %707 = vmatpush1.msra.mxu0 0.0
        %708 = vmatprep.subr.mxu0 0.0
        %709 = vmatpush1.msra.mxu0 0.0
        %710 = vmatprep.subr.mxu0 0.0
        %711 = vmatpush1.msra.mxu0 0.0
        %712 = vmatprep.subr.mxu0 0.0
        %713 = vmatpush1.msra.mxu0 0.0
        %714 = vmatprep.subr.mxu0 0.0
        %715 = vmatpush1.msra.mxu0 0.0
        %716 = vmatprep.subr.mxu0 0.0
        %717 = vmatpush1.msra.mxu0 0.0
        %718 = vmatprep.subr.mxu0 0.0
        %719 = vmatpush1.msra.mxu0 0.0
        %720 = vmatprep.subr.mxu0 0.0
        %721 = vmatpush1.msra.mxu0 0.0
        %722 = vmatprep.subr.mxu0 0.0
        %723 = vmatpush1.msra.mxu0 0.0
        %724 = vmatprep.subr.mxu0 0.0
        %725 = vmatpush1.msra.mxu0 0.0
        %726 = vmatprep.subr.mxu0 0.0
        %727 = vmatpush1.msra.mxu0 0.0
        %728 = vmatprep.subr.mxu0 0.0
        %729 = vmatpush1.msra.mxu0 0.0
        %730 = vmatprep.subr.mxu0 0.0
        %731 = vmatpush1.msra.mxu0 0.0
        %732 = vmatprep.subr.mxu0 0.0
        %733 = vmatpush1.msra.mxu0 0.0
        %734 = vmatprep.subr.mxu0 0.0
        %735 = vmatpush1.msra.mxu0 0.0
        %736 = vmatprep.subr.mxu0 0.0
        %737 = vmatpush1.msra.mxu0 0.0
        %738 = vmatprep.subr.mxu0 0.0
        %739 = vmatpush1.msra.mxu0 0.0
        %740 = vmatprep.subr.mxu0 0.0
        %741 = vmatpush1.msra.mxu0 0.0
        %742 = vmatprep.mubr.f32.mxu0 0.0
        %743 = vmatmul.mubr.f32.gmra.mrb[0].mxu0 %v583
        %v744 = vpop.f32.mrb[0].mxu0
        %v745 = vadd.f32 %v515, %v744
        %v746 = vpop.f32.mrb[0].mxu0
        %747 = vmatprep.mubr.f32.mxu0 0.0
        %748 = vmatmul.mubr.f32.gmra.mrb[0].mxu0 %v586
        %v749 = vpop.f32.mrb[0].mxu0
        %v750 = vadd.f32 %v515, %v749
        %v751 = vpop.f32.mrb[0].mxu0
        %752 = vmatprep.mubr.f32.mxu0 0.0
        %753 = vmatmul.mubr.f32.gmra.mrb[0].mxu0 %v589
        %v754 = vpop.f32.mrb[0].mxu0
        %v755 = vadd.f32 %v515, %v754
        %v756 = vpop.f32.mrb[0].mxu0
        %757 = vmatprep.mubr.f32.mxu0 0.0
        %758 = vmatmul.mubr.f32.gmra.mrb[0].mxu0 %v592
        %v759 = vpop.f32.mrb[0].mxu0
        %v760 = vadd.f32 %v515, %v759
        %v761 = vpop.f32.mrb[0].mxu0
        %762 = vmatprep.mubr.f32.mxu0 0.0
        %763 = vmatmul.mubr.f32.gmra.mrb[0].mxu0 %v595
        %v764 = vpop.f32.mrb[0].mxu0
        %v765 = vadd.f32 %v515, %v764
        %v766 = vpop.f32.mrb[0].mxu0
        %767 = vmatprep.mubr.f32.mxu0 0.0
        %768 = vmatmul.mubr.f32.gmra.mrb[0].mxu0 %v598
        %v769 = vpop.f32.mrb[0].mxu0
        %v770 = vadd.f32 %v515, %v769
        %v771 = vpop.f32.mrb[0].mxu0
        %772 = vmatprep.mubr.f32.mxu0 0.0
        %773 = vmatmul.mubr.f32.gmra.mrb[0].mxu0 %v601
        %v774 = vpop.f32.mrb[0].mxu0
        %v775 = vadd.f32 %v515, %v774
        %v776 = vpop.f32.mrb[0].mxu0
        %777 = vmatprep.mubr.f32.mxu0 0.0
        %778 = vmatmul.mubr.f32.gmra.mrb[0].mxu0 %v604
        %v779 = vpop.f32.mrb[0].mxu0
        %v780 = vadd.f32 %v515, %v779
        %v781 = vpop.f32.mrb[0].mxu0
        %782 = vmatprep.mubr.f32.mxu0 0.0
        %783 = vmatmul.mubr.f32.gmra.mrb[0].mxu0 %v607
        %v784 = vpop.f32.mrb[0].mxu0
        %v785 = vadd.f32 %v515, %v784
        %v786 = vpop.f32.mrb[0].mxu0
        %787 = vmatprep.mubr.f32.mxu0 0.0
        %788 = vmatmul.mubr.f32.gmra.mrb[0].mxu0 %v610
        %v789 = vpop.f32.mrb[0].mxu0
        %v790 = vadd.f32 %v515, %v789
        %v791 = vpop.f32.mrb[0].mxu0
        %792 = vmatprep.mubr.f32.mxu0 0.0
        %793 = vmatmul.mubr.f32.gmra.mrb[0].mxu0 %v613
        %v794 = vpop.f32.mrb[0].mxu0
        %v795 = vadd.f32 %v515, %v794
        %v796 = vpop.f32.mrb[0].mxu0
        %797 = vmatprep.mubr.f32.mxu0 0.0
        %798 = vmatmul.mubr.f32.gmra.mrb[0].mxu0 %v616
        %v799 = vpop.f32.mrb[0].mxu0
        %v800 = vadd.f32 %v515, %v799
        %v801 = vpop.f32.mrb[0].mxu0
        %802 = vmatprep.mubr.f32.mxu0 0.0
        %803 = vmatmul.mubr.f32.gmra.mrb[0].mxu0 %v619
        %v804 = vpop.f32.mrb[0].mxu0
        %v805 = vadd.f32 %v515, %v804
        %v806 = vpop.f32.mrb[0].mxu0
        %807 = vmatprep.mubr.f32.mxu0 0.0
        %808 = vmatmul.mubr.f32.gmra.mrb[0].mxu0 %v622
        %v809 = vpop.f32.mrb[0].mxu0
        %v810 = vadd.f32 %v515, %v809
        %v811 = vpop.f32.mrb[0].mxu0
        %812 = vmatprep.mubr.f32.mxu0 0.0
        %813 = vmatmul.mubr.f32.gmra.mrb[0].mxu0 %v625
        %v814 = vpop.f32.mrb[0].mxu0
        %v815 = vadd.f32 %v515, %v814
        %v816 = vpop.f32.mrb[0].mxu0
        %817 = vmatprep.mubr.f32.mxu0 0.0
        %818 = vmatmul.mubr.f32.gmra.mrb[0].mxu0 %v628
        %v819 = vpop.f32.mrb[0].mxu0
        %v820 = vadd.f32 %v515, %v819
        %v821 = vpop.f32.mrb[0].mxu0
        %822 = vmatprep.mubr.f32.mxu0 0.0
        %823 = vmatmul.mubr.f32.gmra.mrb[0].mxu0 %v631
        %v824 = vpop.f32.mrb[0].mxu0
        %v825 = vadd.f32 %v515, %v824
        %v826 = vpop.f32.mrb[0].mxu0
        %827 = vmatprep.mubr.f32.mxu0 0.0
        %828 = vmatmul.mubr.f32.gmra.mrb[0].mxu0 %v634
        %v829 = vpop.f32.mrb[0].mxu0
        %v830 = vadd.f32 %v515, %v829
        %v831 = vpop.f32.mrb[0].mxu0
        %832 = vmatprep.mubr.f32.mxu0 0.0
        %833 = vmatmul.mubr.f32.gmra.mrb[0].mxu0 %v637
        %v834 = vpop.f32.mrb[0].mxu0
        %v835 = vadd.f32 %v515, %v834
        %v836 = vpop.f32.mrb[0].mxu0
        %837 = vmatprep.mubr.f32.mxu0 0.0
        %838 = vmatmul.mubr.f32.gmra.mrb[0].mxu0 %v640
        %v839 = vpop.f32.mrb[0].mxu0
        %v840 = vadd.f32 %v515, %v839
        %v841 = vpop.f32.mrb[0].mxu0
        %842 = vmatprep.mubr.f32.mxu0 0.0
        %843 = vmatmul.mubr.f32.gmra.mrb[0].mxu0 %v643
        %v844 = vpop.f32.mrb[0].mxu0
        %v845 = vadd.f32 %v515, %v844
        %v846 = vpop.f32.mrb[0].mxu0
        %847 = vmatprep.mubr.f32.mxu0 0.0
        %848 = vmatmul.mubr.f32.gmra.mrb[0].mxu0 %v646
        %v849 = vpop.f32.mrb[0].mxu0
        %v850 = vadd.f32 %v515, %v849
        %v851 = vpop.f32.mrb[0].mxu0
        %852 = vmatprep.mubr.f32.mxu0 0.0
        %853 = vmatmul.mubr.f32.gmra.mrb[0].mxu0 %v649
        %v854 = vpop.f32.mrb[0].mxu0
        %v855 = vadd.f32 %v515, %v854
        %v856 = vpop.f32.mrb[0].mxu0
        %857 = vmatprep.mubr.f32.mxu0 0.0
        %858 = vmatmul.mubr.f32.gmra.mrb[0].mxu0 %v652
        %v859 = vpop.f32.mrb[0].mxu0
        %v860 = vadd.f32 %v515, %v859
        %v861 = vpop.f32.mrb[0].mxu0
        %862 = vmatprep.mubr.f32.mxu0 0.0
        %863 = vmatmul.mubr.f32.gmra.mrb[0].mxu0 %v655
        %v864 = vpop.f32.mrb[0].mxu0
        %v865 = vadd.f32 %v515, %v864
        %v866 = vpop.f32.mrb[0].mxu0
        %867 = vmatprep.mubr.f32.mxu0 0.0
        %868 = vmatmul.mubr.f32.gmra.mrb[0].mxu0 %v658
        %v869 = vpop.f32.mrb[0].mxu0
        %v870 = vadd.f32 %v515, %v869
        %v871 = vpop.f32.mrb[0].mxu0
        %872 = vmatprep.mubr.f32.mxu0 0.0
        %873 = vmatmul.mubr.f32.gmra.mrb[0].mxu0 %v661
        %v874 = vpop.f32.mrb[0].mxu0
        %v875 = vadd.f32 %v515, %v874
        %v876 = vpop.f32.mrb[0].mxu0
        %877 = vmatprep.mubr.f32.mxu0 0.0
        %878 = vmatmul.mubr.f32.gmra.mrb[0].mxu0 %v664
        %v879 = vpop.f32.mrb[0].mxu0
        %v880 = vadd.f32 %v515, %v879
        %v881 = vpop.f32.mrb[0].mxu0
        %882 = vmatprep.mubr.f32.mxu0 0.0
        %883 = vmatmul.mubr.f32.gmra.mrb[0].mxu0 %v667
        %v884 = vpop.f32.mrb[0].mxu0
        %v885 = vadd.f32 %v515, %v884
        %v886 = vpop.f32.mrb[0].mxu0
        %887 = vmatprep.mubr.f32.mxu0 0.0
        %888 = vmatmul.mubr.f32.gmra.mrb[0].mxu0 %v670
        %v889 = vpop.f32.mrb[0].mxu0
        %v890 = vadd.f32 %v515, %v889
        %v891 = vpop.f32.mrb[0].mxu0
        %892 = vmatprep.mubr.f32.mxu0 0.0
        %893 = vmatmul.mubr.f32.gmra.mrb[0].mxu0 %v673
        %v894 = vpop.f32.mrb[0].mxu0
        %v895 = vadd.f32 %v515, %v894
        %v896 = vpop.f32.mrb[0].mxu0
        %897 = vmatprep.mubr.f32.mxu0 0.0
        %898 = vmatmul.mubr.f32.gmra.mrb[0].mxu0 %v676
        %v899 = vpop.f32.mrb[0].mxu0
        %v900 = vadd.f32 %v515, %v899
        %v901 = vpop.f32.mrb[0].mxu0
        %902 = vdwg.mxu0
        %v903 = vld [vmem:[%s368] sm:$0xff]
        %v904 = vld [vmem:[%s368 + $0x8] sm:$0xff]
        %v905 = vld [vmem:[%s368 + $0x10] sm:$0xff]
        %v906 = vld [vmem:[%s368 + $0x18] sm:$0xff]
        %v907 = vld [vmem:[%s368 + $0x20] sm:$0xff]
        %v908 = vld [vmem:[%s368 + $0x28] sm:$0xff]
        %v909 = vld [vmem:[%s368 + $0x30] sm:$0xff]
        %v910 = vld [vmem:[%s368 + $0x38] sm:$0xff]
        %v911 = vld [vmem:[%s368 + $0x40] sm:$0xff]
        %v912 = vld [vmem:[%s368 + $0x48] sm:$0xff]
        %v913 = vld [vmem:[%s368 + $0x50] sm:$0xff]
        %v914 = vld [vmem:[%s368 + $0x58] sm:$0xff]
        %v915 = vld [vmem:[%s368 + $0x60] sm:$0xff]
        %v916 = vld [vmem:[%s368 + $0x68] sm:$0xff]
        %v917 = vld [vmem:[%s368 + $0x70] sm:$0xff]
        %v918 = vld [vmem:[%s368 + $0x78] sm:$0xff]
        %v919 = vld [vmem:[%s4] sm:$0xff]
        %v920 = vld [vmem:[%s4 + $0x8] sm:$0xff]
        %v921 = vld [vmem:[%s4 + $0x10] sm:$0xff]
        %v922 = vld [vmem:[%s4 + $0x18] sm:$0xff]
        %v923 = vld [vmem:[%s4 + $0x20] sm:$0xff]
        %v924 = vld [vmem:[%s4 + $0x28] sm:$0xff]
        %v925 = vld [vmem:[%s4 + $0x30] sm:$0xff]
        %v926 = vld [vmem:[%s4 + $0x38] sm:$0xff]
        %v927 = vld [vmem:[%s5] sm:$0x1]
        %v929 = vlaneseq
        %v930 = vshrl.u32 %v929, 7
        %v931 = vsub.s32 0, %v930
        %v932 = vrot.slane %v927, %v931
        %934 = vxpose.xlu0.b32.start [1/16] %v903, 128
        %935 = vxpose.xlu0.b32.cont [2/16] %v905, 128
        %936 = vxpose.xlu0.b32.cont [3/16] %v907, 128
        %937 = vxpose.xlu0.b32.cont [4/16] %v909, 128
        %938 = vxpose.xlu0.b32.cont [5/16] %v911, 128
        %939 = vxpose.xlu0.b32.cont [6/16] %v913, 128
        %940 = vxpose.xlu0.b32.cont [7/16] %v915, 128
        %941 = vxpose.xlu0.b32.cont [8/16] %v917, 128
        %942 = vxpose.xlu0.b32.cont [9/16] 0.0, 128
        %943 = vxpose.xlu0.b32.cont [10/16] 0.0, 128
        %944 = vxpose.xlu0.b32.cont [11/16] 0.0, 128
        %945 = vxpose.xlu0.b32.cont [12/16] 0.0, 128
        %946 = vxpose.xlu0.b32.cont [13/16] 0.0, 128
        %947 = vxpose.xlu0.b32.cont [14/16] 0.0, 128
        %948 = vxpose.xlu0.b32.cont [15/16] 0.0, 128
        %949 = vxpose.xlu0.b32.end [16/16] 0.0, 128
        %v950 = vpop.trf.xlu0
        %v951 = vpop.trf.xlu0
        %v952 = vpop.trf.xlu0
        %v953 = vpop.trf.xlu0
        %v954 = vpop.trf.xlu0
        %v955 = vpop.trf.xlu0
        %v956 = vpop.trf.xlu0
        %v957 = vpop.trf.xlu0
        %v958 = vpop.trf.xlu0
        %v959 = vpop.trf.xlu0
        %v960 = vpop.trf.xlu0
        %v961 = vpop.trf.xlu0
        %v962 = vpop.trf.xlu0
        %v963 = vpop.trf.xlu0
        %v964 = vpop.trf.xlu0
        %v965 = vpop.trf.xlu0
        %966 = vxpose.xlu0.b32.start [1/16] %v904, 128
        %967 = vxpose.xlu0.b32.cont [2/16] %v906, 128
        %968 = vxpose.xlu0.b32.cont [3/16] %v908, 128
        %969 = vxpose.xlu0.b32.cont [4/16] %v910, 128
        %970 = vxpose.xlu0.b32.cont [5/16] %v912, 128
        %971 = vxpose.xlu0.b32.cont [6/16] %v914, 128
        %972 = vxpose.xlu0.b32.cont [7/16] %v916, 128
        %973 = vxpose.xlu0.b32.cont [8/16] %v918, 128
        %974 = vxpose.xlu0.b32.cont [9/16] 0.0, 128
        %975 = vxpose.xlu0.b32.cont [10/16] 0.0, 128
        %976 = vxpose.xlu0.b32.cont [11/16] 0.0, 128
        %977 = vxpose.xlu0.b32.cont [12/16] 0.0, 128
        %978 = vxpose.xlu0.b32.cont [13/16] 0.0, 128
        %979 = vxpose.xlu0.b32.cont [14/16] 0.0, 128
        %980 = vxpose.xlu0.b32.cont [15/16] 0.0, 128
        %981 = vxpose.xlu0.b32.end [16/16] 0.0, 128
        %v982 = vpop.trf.xlu0
        %v983 = vpop.trf.xlu0
        %v984 = vpop.trf.xlu0
        %v985 = vpop.trf.xlu0
        %v986 = vpop.trf.xlu0
        %v987 = vpop.trf.xlu0
        %v988 = vpop.trf.xlu0
        %v989 = vpop.trf.xlu0
        %v990 = vpop.trf.xlu0
        %v991 = vpop.trf.xlu0
        %v992 = vpop.trf.xlu0
        %v993 = vpop.trf.xlu0
        %v994 = vpop.trf.xlu0
        %v995 = vpop.trf.xlu0
        %v996 = vpop.trf.xlu0
        %v997 = vpop.trf.xlu0
        %v999 = vsel %vm581, %v950, 0
        %v1002 = vsel %vm581, %v951, 0
        %v1005 = vsel %vm581, %v952, 0
        %v1008 = vsel %vm581, %v953, 0
        %v1011 = vsel %vm581, %v954, 0
        %v1014 = vsel %vm581, %v955, 0
        %v1017 = vsel %vm581, %v956, 0
        %v1020 = vsel %vm581, %v957, 0
        %v1023 = vsel %vm581, %v958, 0
        %v1026 = vsel %vm581, %v959, 0
        %v1029 = vsel %vm581, %v960, 0
        %v1032 = vsel %vm581, %v961, 0
        %v1035 = vsel %vm581, %v962, 0
        %v1038 = vsel %vm581, %v963, 0
        %v1041 = vsel %vm581, %v964, 0
        %v1044 = vsel %vm581, %v965, 0
        %v1047 = vsel %vm581, %v982, 0
        %v1050 = vsel %vm581, %v983, 0
        %v1053 = vsel %vm581, %v984, 0
        %v1056 = vsel %vm581, %v985, 0
        %v1059 = vsel %vm581, %v986, 0
        %v1062 = vsel %vm581, %v987, 0
        %v1065 = vsel %vm581, %v988, 0
        %v1068 = vsel %vm581, %v989, 0
        %v1071 = vsel %vm581, %v990, 0
        %v1074 = vsel %vm581, %v991, 0
        %v1077 = vsel %vm581, %v992, 0
        %v1080 = vsel %vm581, %v993, 0
        %v1083 = vsel %vm581, %v994, 0
        %v1086 = vsel %vm581, %v995, 0
        %v1089 = vsel %vm581, %v996, 0
        %v1092 = vsel %vm581, %v997, 0
        %1094 = vmatprep.subr.mxu0 0.0
        %1095 = vmatpush1.msra.mxu0 %v919
        %1096 = vmatprep.subr.mxu0 0.0
        %1097 = vmatpush1.msra.mxu0 %v920
        %1098 = vmatprep.subr.mxu0 0.0
        %1099 = vmatpush1.msra.mxu0 %v921
        %1100 = vmatprep.subr.mxu0 0.0
        %1101 = vmatpush1.msra.mxu0 %v922
        %1102 = vmatprep.subr.mxu0 0.0
        %1103 = vmatpush1.msra.mxu0 %v923
        %1104 = vmatprep.subr.mxu0 0.0
        %1105 = vmatpush1.msra.mxu0 %v924
        %1106 = vmatprep.subr.mxu0 0.0
        %1107 = vmatpush1.msra.mxu0 %v925
        %1108 = vmatprep.subr.mxu0 0.0
        %1109 = vmatpush1.msra.mxu0 %v926
        %1110 = vmatprep.subr.mxu0 0.0
        %1111 = vmatpush1.msra.mxu0 0.0
        %1112 = vmatprep.subr.mxu0 0.0
        %1113 = vmatpush1.msra.mxu0 0.0
        %1114 = vmatprep.subr.mxu0 0.0
        %1115 = vmatpush1.msra.mxu0 0.0
        %1116 = vmatprep.subr.mxu0 0.0
        %1117 = vmatpush1.msra.mxu0 0.0
        %1118 = vmatprep.subr.mxu0 0.0
        %1119 = vmatpush1.msra.mxu0 0.0
        %1120 = vmatprep.subr.mxu0 0.0
        %1121 = vmatpush1.msra.mxu0 0.0
        %1122 = vmatprep.subr.mxu0 0.0
        %1123 = vmatpush1.msra.mxu0 0.0
        %1124 = vmatprep.subr.mxu0 0.0
        %1125 = vmatpush1.msra.mxu0 0.0
        %1126 = vmatprep.subr.mxu0 0.0
        %1127 = vmatpush1.msra.mxu0 0.0
        %1128 = vmatprep.subr.mxu0 0.0
        %1129 = vmatpush1.msra.mxu0 0.0
        %1130 = vmatprep.subr.mxu0 0.0
        %1131 = vmatpush1.msra.mxu0 0.0
        %1132 = vmatprep.subr.mxu0 0.0
        %1133 = vmatpush1.msra.mxu0 0.0
        %1134 = vmatprep.subr.mxu0 0.0
        %1135 = vmatpush1.msra.mxu0 0.0
        %1136 = vmatprep.subr.mxu0 0.0
        %1137 = vmatpush1.msra.mxu0 0.0
        %1138 = vmatprep.subr.mxu0 0.0
        %1139 = vmatpush1.msra.mxu0 0.0
        %1140 = vmatprep.subr.mxu0 0.0
        %1141 = vmatpush1.msra.mxu0 0.0
        %1142 = vmatprep.subr.mxu0 0.0
        %1143 = vmatpush1.msra.mxu0 0.0
        %1144 = vmatprep.subr.mxu0 0.0
        %1145 = vmatpush1.msra.mxu0 0.0
        %1146 = vmatprep.subr.mxu0 0.0
        %1147 = vmatpush1.msra.mxu0 0.0
        %1148 = vmatprep.subr.mxu0 0.0
        %1149 = vmatpush1.msra.mxu0 0.0
        %1150 = vmatprep.subr.mxu0 0.0
        %1151 = vmatpush1.msra.mxu0 0.0
        %1152 = vmatprep.subr.mxu0 0.0
        %1153 = vmatpush1.msra.mxu0 0.0
        %1154 = vmatprep.subr.mxu0 0.0
        %1155 = vmatpush1.msra.mxu0 0.0
        %1156 = vmatprep.subr.mxu0 0.0
        %1157 = vmatpush1.msra.mxu0 0.0
        %1158 = vmatprep.mubr.f32.mxu0 0.0
        %1159 = vmatmul.mubr.f32.gmra.mrb[0].mxu0 %v999
        %v1160 = vpop.f32.mrb[0].mxu0
        %v1161 = vadd.f32 %v932, %v1160
        %v1162 = vpop.f32.mrb[0].mxu0
        %1163 = vmatprep.mubr.f32.mxu0 0.0
        %1164 = vmatmul.mubr.f32.gmra.mrb[0].mxu0 %v1002
        %v1165 = vpop.f32.mrb[0].mxu0
        %v1166 = vadd.f32 %v932, %v1165
        %v1167 = vpop.f32.mrb[0].mxu0
        %1168 = vmatprep.mubr.f32.mxu0 0.0
        %1169 = vmatmul.mubr.f32.gmra.mrb[0].mxu0 %v1005
        %v1170 = vpop.f32.mrb[0].mxu0
        %v1171 = vadd.f32 %v932, %v1170
        %v1172 = vpop.f32.mrb[0].mxu0
        %1173 = vmatprep.mubr.f32.mxu0 0.0
        %1174 = vmatmul.mubr.f32.gmra.mrb[0].mxu0 %v1008
        %v1175 = vpop.f32.mrb[0].mxu0
        %v1176 = vadd.f32 %v932, %v1175
        %v1177 = vpop.f32.mrb[0].mxu0
        %1178 = vmatprep.mubr.f32.mxu0 0.0
        %1179 = vmatmul.mubr.f32.gmra.mrb[0].mxu0 %v1011
        %v1180 = vpop.f32.mrb[0].mxu0
        %v1181 = vadd.f32 %v932, %v1180
        %v1182 = vpop.f32.mrb[0].mxu0
        %1183 = vmatprep.mubr.f32.mxu0 0.0
        %1184 = vmatmul.mubr.f32.gmra.mrb[0].mxu0 %v1014
        %v1185 = vpop.f32.mrb[0].mxu0
        %v1186 = vadd.f32 %v932, %v1185
        %v1187 = vpop.f32.mrb[0].mxu0
        %1188 = vmatprep.mubr.f32.mxu0 0.0
        %1189 = vmatmul.mubr.f32.gmra.mrb[0].mxu0 %v1017
        %v1190 = vpop.f32.mrb[0].mxu0
        %v1191 = vadd.f32 %v932, %v1190
        %v1192 = vpop.f32.mrb[0].mxu0
        %1193 = vmatprep.mubr.f32.mxu0 0.0
        %1194 = vmatmul.mubr.f32.gmra.mrb[0].mxu0 %v1020
        %v1195 = vpop.f32.mrb[0].mxu0
        %v1196 = vadd.f32 %v932, %v1195
        %v1197 = vpop.f32.mrb[0].mxu0
        %1198 = vmatprep.mubr.f32.mxu0 0.0
        %1199 = vmatmul.mubr.f32.gmra.mrb[0].mxu0 %v1023
        %v1200 = vpop.f32.mrb[0].mxu0
        %v1201 = vadd.f32 %v932, %v1200
        %v1202 = vpop.f32.mrb[0].mxu0
        %1203 = vmatprep.mubr.f32.mxu0 0.0
        %1204 = vmatmul.mubr.f32.gmra.mrb[0].mxu0 %v1026
        %v1205 = vpop.f32.mrb[0].mxu0
        %v1206 = vadd.f32 %v932, %v1205
        %v1207 = vpop.f32.mrb[0].mxu0
        %1208 = vmatprep.mubr.f32.mxu0 0.0
        %1209 = vmatmul.mubr.f32.gmra.mrb[0].mxu0 %v1029
        %v1210 = vpop.f32.mrb[0].mxu0
        %v1211 = vadd.f32 %v932, %v1210
        %v1212 = vpop.f32.mrb[0].mxu0
        %1213 = vmatprep.mubr.f32.mxu0 0.0
        %1214 = vmatmul.mubr.f32.gmra.mrb[0].mxu0 %v1032
        %v1215 = vpop.f32.mrb[0].mxu0
        %v1216 = vadd.f32 %v932, %v1215
        %v1217 = vpop.f32.mrb[0].mxu0
        %1218 = vmatprep.mubr.f32.mxu0 0.0
        %1219 = vmatmul.mubr.f32.gmra.mrb[0].mxu0 %v1035
        %v1220 = vpop.f32.mrb[0].mxu0
        %v1221 = vadd.f32 %v932, %v1220
        %v1222 = vpop.f32.mrb[0].mxu0
        %1223 = vmatprep.mubr.f32.mxu0 0.0
        %1224 = vmatmul.mubr.f32.gmra.mrb[0].mxu0 %v1038
        %v1225 = vpop.f32.mrb[0].mxu0
        %v1226 = vadd.f32 %v932, %v1225
        %v1227 = vpop.f32.mrb[0].mxu0
        %1228 = vmatprep.mubr.f32.mxu0 0.0
        %1229 = vmatmul.mubr.f32.gmra.mrb[0].mxu0 %v1041
        %v1230 = vpop.f32.mrb[0].mxu0
        %v1231 = vadd.f32 %v932, %v1230
        %v1232 = vpop.f32.mrb[0].mxu0
        %1233 = vmatprep.mubr.f32.mxu0 0.0
        %1234 = vmatmul.mubr.f32.gmra.mrb[0].mxu0 %v1044
        %v1235 = vpop.f32.mrb[0].mxu0
        %v1236 = vadd.f32 %v932, %v1235
        %v1237 = vpop.f32.mrb[0].mxu0
        %1238 = vmatprep.mubr.f32.mxu0 0.0
        %1239 = vmatmul.mubr.f32.gmra.mrb[0].mxu0 %v1047
        %v1240 = vpop.f32.mrb[0].mxu0
        %v1241 = vadd.f32 %v932, %v1240
        %v1242 = vpop.f32.mrb[0].mxu0
        %1243 = vmatprep.mubr.f32.mxu0 0.0
        %1244 = vmatmul.mubr.f32.gmra.mrb[0].mxu0 %v1050
        %v1245 = vpop.f32.mrb[0].mxu0
        %v1246 = vadd.f32 %v932, %v1245
        %v1247 = vpop.f32.mrb[0].mxu0
        %1248 = vmatprep.mubr.f32.mxu0 0.0
        %1249 = vmatmul.mubr.f32.gmra.mrb[0].mxu0 %v1053
        %v1250 = vpop.f32.mrb[0].mxu0
        %v1251 = vadd.f32 %v932, %v1250
        %v1252 = vpop.f32.mrb[0].mxu0
        %1253 = vmatprep.mubr.f32.mxu0 0.0
        %1254 = vmatmul.mubr.f32.gmra.mrb[0].mxu0 %v1056
        %v1255 = vpop.f32.mrb[0].mxu0
        %v1256 = vadd.f32 %v932, %v1255
        %v1257 = vpop.f32.mrb[0].mxu0
        %1258 = vmatprep.mubr.f32.mxu0 0.0
        %1259 = vmatmul.mubr.f32.gmra.mrb[0].mxu0 %v1059
        %v1260 = vpop.f32.mrb[0].mxu0
        %v1261 = vadd.f32 %v932, %v1260
        %v1262 = vpop.f32.mrb[0].mxu0
        %1263 = vmatprep.mubr.f32.mxu0 0.0
        %1264 = vmatmul.mubr.f32.gmra.mrb[0].mxu0 %v1062
        %v1265 = vpop.f32.mrb[0].mxu0
        %v1266 = vadd.f32 %v932, %v1265
        %v1267 = vpop.f32.mrb[0].mxu0
        %1268 = vmatprep.mubr.f32.mxu0 0.0
        %1269 = vmatmul.mubr.f32.gmra.mrb[0].mxu0 %v1065
        %v1270 = vpop.f32.mrb[0].mxu0
        %v1271 = vadd.f32 %v932, %v1270
        %v1272 = vpop.f32.mrb[0].mxu0
        %1273 = vmatprep.mubr.f32.mxu0 0.0
        %1274 = vmatmul.mubr.f32.gmra.mrb[0].mxu0 %v1068
        %v1275 = vpop.f32.mrb[0].mxu0
        %v1276 = vadd.f32 %v932, %v1275
        %v1277 = vpop.f32.mrb[0].mxu0
        %1278 = vmatprep.mubr.f32.mxu0 0.0
        %1279 = vmatmul.mubr.f32.gmra.mrb[0].mxu0 %v1071
        %v1280 = vpop.f32.mrb[0].mxu0
        %v1281 = vadd.f32 %v932, %v1280
        %v1282 = vpop.f32.mrb[0].mxu0
        %1283 = vmatprep.mubr.f32.mxu0 0.0
        %1284 = vmatmul.mubr.f32.gmra.mrb[0].mxu0 %v1074
        %v1285 = vpop.f32.mrb[0].mxu0
        %v1286 = vadd.f32 %v932, %v1285
        %v1287 = vpop.f32.mrb[0].mxu0
        %1288 = vmatprep.mubr.f32.mxu0 0.0
        %1289 = vmatmul.mubr.f32.gmra.mrb[0].mxu0 %v1077
        %v1290 = vpop.f32.mrb[0].mxu0
        %v1291 = vadd.f32 %v932, %v1290
        %v1292 = vpop.f32.mrb[0].mxu0
        %1293 = vmatprep.mubr.f32.mxu0 0.0
        %1294 = vmatmul.mubr.f32.gmra.mrb[0].mxu0 %v1080
        %v1295 = vpop.f32.mrb[0].mxu0
        %v1296 = vadd.f32 %v932, %v1295
        %v1297 = vpop.f32.mrb[0].mxu0
        %1298 = vmatprep.mubr.f32.mxu0 0.0
        %1299 = vmatmul.mubr.f32.gmra.mrb[0].mxu0 %v1083
        %v1300 = vpop.f32.mrb[0].mxu0
        %v1301 = vadd.f32 %v932, %v1300
        %v1302 = vpop.f32.mrb[0].mxu0
        %1303 = vmatprep.mubr.f32.mxu0 0.0
        %1304 = vmatmul.mubr.f32.gmra.mrb[0].mxu0 %v1086
        %v1305 = vpop.f32.mrb[0].mxu0
        %v1306 = vadd.f32 %v932, %v1305
        %v1307 = vpop.f32.mrb[0].mxu0
        %1308 = vmatprep.mubr.f32.mxu0 0.0
        %1309 = vmatmul.mubr.f32.gmra.mrb[0].mxu0 %v1089
        %v1310 = vpop.f32.mrb[0].mxu0
        %v1311 = vadd.f32 %v932, %v1310
        %v1312 = vpop.f32.mrb[0].mxu0
        %1313 = vmatprep.mubr.f32.mxu0 0.0
        %1314 = vmatmul.mubr.f32.gmra.mrb[0].mxu0 %v1092
        %v1315 = vpop.f32.mrb[0].mxu0
        %v1316 = vadd.f32 %v932, %v1315
        %v1317 = vpop.f32.mrb[0].mxu0
        %1318 = vdwg.mxu0
        %vm1319 = vcmask 654336
        %1320 = vst.msk [vmem:[%s464] sm:$0xff] %vm1319, %v745
        %1321 = vst.msk [vmem:[%s464 + $0x8] sm:$0xff] %vm1319, %v750
        %1322 = vst.msk [vmem:[%s464 + $0x10] sm:$0xff] %vm1319, %v755
        %1323 = vst.msk [vmem:[%s464 + $0x18] sm:$0xff] %vm1319, %v760
        %1324 = vst.msk [vmem:[%s464 + $0x20] sm:$0xff] %vm1319, %v765
        %1325 = vst.msk [vmem:[%s464 + $0x28] sm:$0xff] %vm1319, %v770
        %1326 = vst.msk [vmem:[%s464 + $0x30] sm:$0xff] %vm1319, %v775
        %1327 = vst.msk [vmem:[%s464 + $0x38] sm:$0xff] %vm1319, %v780
        %1328 = vst.msk [vmem:[%s464 + $0x40] sm:$0xff] %vm1319, %v785
        %1329 = vst.msk [vmem:[%s464 + $0x48] sm:$0xff] %vm1319, %v790
        %1330 = vst.msk [vmem:[%s464 + $0x50] sm:$0xff] %vm1319, %v795
        %1331 = vst.msk [vmem:[%s464 + $0x58] sm:$0xff] %vm1319, %v800
        %1332 = vst.msk [vmem:[%s464 + $0x60] sm:$0xff] %vm1319, %v805
        %1333 = vst.msk [vmem:[%s464 + $0x68] sm:$0xff] %vm1319, %v810
        %1334 = vst.msk [vmem:[%s464 + $0x70] sm:$0xff] %vm1319, %v815
        %1335 = vst.msk [vmem:[%s464 + $0x78] sm:$0xff] %vm1319, %v820
        %1336 = vst.msk [vmem:[%s464 + $0x80] sm:$0xff] %vm1319, %v825
        %1337 = vst.msk [vmem:[%s464 + $0x88] sm:$0xff] %vm1319, %v830
        %1338 = vst.msk [vmem:[%s464 + $0x90] sm:$0xff] %vm1319, %v835
        %1339 = vst.msk [vmem:[%s464 + $0x98] sm:$0xff] %vm1319, %v840
        %1340 = vst.msk [vmem:[%s464 + $0xa0] sm:$0xff] %vm1319, %v845
        %1341 = vst.msk [vmem:[%s464 + $0xa8] sm:$0xff] %vm1319, %v850
        %1342 = vst.msk [vmem:[%s464 + $0xb0] sm:$0xff] %vm1319, %v855
        %1343 = vst.msk [vmem:[%s464 + $0xb8] sm:$0xff] %vm1319, %v860
        %1344 = vst.msk [vmem:[%s464 + $0xc0] sm:$0xff] %vm1319, %v865
        %1345 = vst.msk [vmem:[%s464 + $0xc8] sm:$0xff] %vm1319, %v870
        %1346 = vst.msk [vmem:[%s464 + $0xd0] sm:$0xff] %vm1319, %v875
        %1347 = vst.msk [vmem:[%s464 + $0xd8] sm:$0xff] %vm1319, %v880
        %1348 = vst.msk [vmem:[%s464 + $0xe0] sm:$0xff] %vm1319, %v885
        %1349 = vst.msk [vmem:[%s464 + $0xe8] sm:$0xff] %vm1319, %v890
        %1350 = vst.msk [vmem:[%s464 + $0xf0] sm:$0xff] %vm1319, %v895
        %1351 = vst.msk [vmem:[%s464 + $0xf8] sm:$0xff] %vm1319, %v900
        %vm1352 = vcmask 31744
        %1353 = vst.msk [vmem:[%s474] sm:$0xff] %vm1352, %v1161
        %1354 = vst.msk [vmem:[%s474 + $0x8] sm:$0xff] %vm1352, %v1166
        %1355 = vst.msk [vmem:[%s474 + $0x10] sm:$0xff] %vm1352, %v1171
        %1356 = vst.msk [vmem:[%s474 + $0x18] sm:$0xff] %vm1352, %v1176
        %1357 = vst.msk [vmem:[%s474 + $0x20] sm:$0xff] %vm1352, %v1181
        %1358 = vst.msk [vmem:[%s474 + $0x28] sm:$0xff] %vm1352, %v1186
        %1359 = vst.msk [vmem:[%s474 + $0x30] sm:$0xff] %vm1352, %v1191
        %1360 = vst.msk [vmem:[%s474 + $0x38] sm:$0xff] %vm1352, %v1196
        %1361 = vst.msk [vmem:[%s474 + $0x40] sm:$0xff] %vm1352, %v1201
        %1362 = vst.msk [vmem:[%s474 + $0x48] sm:$0xff] %vm1352, %v1206
        %1363 = vst.msk [vmem:[%s474 + $0x50] sm:$0xff] %vm1352, %v1211
        %1364 = vst.msk [vmem:[%s474 + $0x58] sm:$0xff] %vm1352, %v1216
        %1365 = vst.msk [vmem:[%s474 + $0x60] sm:$0xff] %vm1352, %v1221
        %1366 = vst.msk [vmem:[%s474 + $0x68] sm:$0xff] %vm1352, %v1226
        %1367 = vst.msk [vmem:[%s474 + $0x70] sm:$0xff] %vm1352, %v1231
        %1368 = vst.msk [vmem:[%s474 + $0x78] sm:$0xff] %vm1352, %v1236
        %1369 = vst.msk [vmem:[%s474 + $0x80] sm:$0xff] %vm1352, %v1241
        %1370 = vst.msk [vmem:[%s474 + $0x88] sm:$0xff] %vm1352, %v1246
        %1371 = vst.msk [vmem:[%s474 + $0x90] sm:$0xff] %vm1352, %v1251
        %1372 = vst.msk [vmem:[%s474 + $0x98] sm:$0xff] %vm1352, %v1256
        %1373 = vst.msk [vmem:[%s474 + $0xa0] sm:$0xff] %vm1352, %v1261
        %1374 = vst.msk [vmem:[%s474 + $0xa8] sm:$0xff] %vm1352, %v1266
        %1375 = vst.msk [vmem:[%s474 + $0xb0] sm:$0xff] %vm1352, %v1271
        %1376 = vst.msk [vmem:[%s474 + $0xb8] sm:$0xff] %vm1352, %v1276
        %1377 = vst.msk [vmem:[%s474 + $0xc0] sm:$0xff] %vm1352, %v1281
        %1378 = vst.msk [vmem:[%s474 + $0xc8] sm:$0xff] %vm1352, %v1286
        %1379 = vst.msk [vmem:[%s474 + $0xd0] sm:$0xff] %vm1352, %v1291
        %1380 = vst.msk [vmem:[%s474 + $0xd8] sm:$0xff] %vm1352, %v1296
        %1381 = vst.msk [vmem:[%s474 + $0xe0] sm:$0xff] %vm1352, %v1301
        %1382 = vst.msk [vmem:[%s474 + $0xe8] sm:$0xff] %vm1352, %v1306
        %1383 = vst.msk [vmem:[%s474 + $0xf0] sm:$0xff] %vm1352, %v1311
        %1384 = vst.msk [vmem:[%s474 + $0xf8] sm:$0xff] %vm1352, %v1316
        %v1385 = vld [vmem:[%s454] sm:$0xff]
        %v1386 = vld [vmem:[%s454 + $0x8] sm:$0xff]
        %v1387 = vld [vmem:[%s454 + $0x10] sm:$0xff]
        %v1388 = vld [vmem:[%s454 + $0x18] sm:$0xff]
        %v1389 = vld [vmem:[%s454 + $0x20] sm:$0xff]
        %v1390 = vld [vmem:[%s454 + $0x28] sm:$0xff]
        %v1391 = vld [vmem:[%s454 + $0x30] sm:$0xff]
        %v1392 = vld [vmem:[%s454 + $0x38] sm:$0xff]
        %v1393 = vld [vmem:[%s454 + $0x40] sm:$0xff]
        %v1394 = vld [vmem:[%s454 + $0x48] sm:$0xff]
        %v1395 = vld [vmem:[%s454 + $0x50] sm:$0xff]
        %v1396 = vld [vmem:[%s454 + $0x58] sm:$0xff]
        %v1397 = vld [vmem:[%s454 + $0x60] sm:$0xff]
        %v1398 = vld [vmem:[%s454 + $0x68] sm:$0xff]
        %v1399 = vld [vmem:[%s454 + $0x70] sm:$0xff]
        %v1400 = vld [vmem:[%s454 + $0x78] sm:$0xff]
        %v1401 = vld [vmem:[%s454 + $0x80] sm:$0xff]
        %v1402 = vld [vmem:[%s454 + $0x88] sm:$0xff]
        %v1403 = vld [vmem:[%s454 + $0x90] sm:$0xff]
        %v1404 = vld [vmem:[%s454 + $0x98] sm:$0xff]
        %v1405 = vld [vmem:[%s454 + $0xa0] sm:$0xff]
        %v1406 = vld [vmem:[%s454 + $0xa8] sm:$0xff]
        %v1407 = vld [vmem:[%s454 + $0xb0] sm:$0xff]
        %v1408 = vld [vmem:[%s454 + $0xb8] sm:$0xff]
        %v1409 = vld [vmem:[%s454 + $0xc0] sm:$0xff]
        %v1410 = vld [vmem:[%s454 + $0xc8] sm:$0xff]
        %v1411 = vld [vmem:[%s454 + $0xd0] sm:$0xff]
        %v1412 = vld [vmem:[%s454 + $0xd8] sm:$0xff]
        %v1413 = vld [vmem:[%s454 + $0xe0] sm:$0xff]
        %v1414 = vld [vmem:[%s454 + $0xe8] sm:$0xff]
        %v1415 = vld [vmem:[%s454 + $0xf0] sm:$0xff]
        %v1416 = vld [vmem:[%s454 + $0xf8] sm:$0xff]
        %v1417 = vmul.f32 %v1161, 32.0
        %v1418 = vmul.f32 %v1166, 32.0
        %v1419 = vmul.f32 %v1171, 32.0
        %v1420 = vmul.f32 %v1176, 32.0
        %v1421 = vmul.f32 %v1181, 32.0
        %v1422 = vmul.f32 %v1186, 32.0
        %v1423 = vmul.f32 %v1191, 32.0
        %v1424 = vmul.f32 %v1196, 32.0
        %v1425 = vmul.f32 %v1201, 32.0
        %v1426 = vmul.f32 %v1206, 32.0
        %v1427 = vmul.f32 %v1211, 32.0
        %v1428 = vmul.f32 %v1216, 32.0
        %v1429 = vmul.f32 %v1221, 32.0
        %v1430 = vmul.f32 %v1226, 32.0
        %v1431 = vmul.f32 %v1231, 32.0
        %v1432 = vmul.f32 %v1236, 32.0
        %v1433 = vmul.f32 %v1241, 32.0
        %v1434 = vmul.f32 %v1246, 32.0
        %v1435 = vmul.f32 %v1251, 32.0
        %v1436 = vmul.f32 %v1256, 32.0
        %v1437 = vmul.f32 %v1261, 32.0
        %v1438 = vmul.f32 %v1266, 32.0
        %v1439 = vmul.f32 %v1271, 32.0
        %v1440 = vmul.f32 %v1276, 32.0
        %v1441 = vmul.f32 %v1281, 32.0
        %v1442 = vmul.f32 %v1286, 32.0
        %v1443 = vmul.f32 %v1291, 32.0
        %v1444 = vmul.f32 %v1296, 32.0
        %v1445 = vmul.f32 %v1301, 32.0
        %v1446 = vmul.f32 %v1306, 32.0
        %v1447 = vmul.f32 %v1311, 32.0
        %v1448 = vmul.f32 %v1316, 32.0
        %v1449 = vadd.f32 %v1417, %v1385
        %v1450 = vadd.f32 %v1418, %v1386
        %v1451 = vadd.f32 %v1419, %v1387
        %v1452 = vadd.f32 %v1420, %v1388
        %v1453 = vadd.f32 %v1421, %v1389
        %v1454 = vadd.f32 %v1422, %v1390
        %v1455 = vadd.f32 %v1423, %v1391
        %v1456 = vadd.f32 %v1424, %v1392
        %v1457 = vadd.f32 %v1425, %v1393
        %v1458 = vadd.f32 %v1426, %v1394
        %v1459 = vadd.f32 %v1427, %v1395
        %v1460 = vadd.f32 %v1428, %v1396
        %v1461 = vadd.f32 %v1429, %v1397
        %v1462 = vadd.f32 %v1430, %v1398
        %v1463 = vadd.f32 %v1431, %v1399
        %v1464 = vadd.f32 %v1432, %v1400
        %v1465 = vadd.f32 %v1433, %v1401
        %v1466 = vadd.f32 %v1434, %v1402
        %v1467 = vadd.f32 %v1435, %v1403
        %v1468 = vadd.f32 %v1436, %v1404
        %v1469 = vadd.f32 %v1437, %v1405
        %v1470 = vadd.f32 %v1438, %v1406
        %v1471 = vadd.f32 %v1439, %v1407
        %v1472 = vadd.f32 %v1440, %v1408
        %v1473 = vadd.f32 %v1441, %v1409
        %v1474 = vadd.f32 %v1442, %v1410
        %v1475 = vadd.f32 %v1443, %v1411
        %v1476 = vadd.f32 %v1444, %v1412
        %v1477 = vadd.f32 %v1445, %v1413
        %v1478 = vadd.f32 %v1446, %v1414
        %v1479 = vadd.f32 %v1447, %v1415
        %v1480 = vadd.f32 %v1448, %v1416
        %v1481 = vmul.f32 %v1161, 1.442695
        %v1482 = vpow.pop %v1481
        %v1483 = vmul.f32 %v1166, 1.442695
        %v1484 = vpow.pop %v1483
        %v1485 = vmul.f32 %v1171, 1.442695
        %v1486 = vpow.pop %v1485
        %v1487 = vmul.f32 %v1176, 1.442695
        %v1488 = vpow.pop %v1487
        %v1489 = vmul.f32 %v1181, 1.442695
        %v1490 = vpow.pop %v1489
        %v1491 = vmul.f32 %v1186, 1.442695
        %v1492 = vpow.pop %v1491
        %v1493 = vmul.f32 %v1191, 1.442695
        %v1494 = vpow.pop %v1493
        %v1495 = vmul.f32 %v1196, 1.442695
        %v1496 = vpow.pop %v1495
        %v1497 = vmul.f32 %v1201, 1.442695
        %v1498 = vpow.pop %v1497
        %v1499 = vmul.f32 %v1206, 1.442695
        %v1500 = vpow.pop %v1499
        %v1501 = vmul.f32 %v1211, 1.442695
        %v1502 = vpow.pop %v1501
        %v1503 = vmul.f32 %v1216, 1.442695
        %v1504 = vpow.pop %v1503
        %v1505 = vmul.f32 %v1221, 1.442695
        %v1506 = vpow.pop %v1505
        %v1507 = vmul.f32 %v1226, 1.442695
        %v1508 = vpow.pop %v1507
        %v1509 = vmul.f32 %v1231, 1.442695
        %v1510 = vpow.pop %v1509
        %v1511 = vmul.f32 %v1236, 1.442695
        %v1512 = vpow.pop %v1511
        %v1513 = vmul.f32 %v1241, 1.442695
        %v1514 = vpow.pop %v1513
        %v1515 = vmul.f32 %v1246, 1.442695
        %v1516 = vpow.pop %v1515
        %v1517 = vmul.f32 %v1251, 1.442695
        %v1518 = vpow.pop %v1517
        %v1519 = vmul.f32 %v1256, 1.442695
        %v1520 = vpow.pop %v1519
        %v1521 = vmul.f32 %v1261, 1.442695
        %v1522 = vpow.pop %v1521
        %v1523 = vmul.f32 %v1266, 1.442695
        %v1524 = vpow.pop %v1523
        %v1525 = vmul.f32 %v1271, 1.442695
        %v1526 = vpow.pop %v1525
        %v1527 = vmul.f32 %v1276, 1.442695
        %v1528 = vpow.pop %v1527
        %v1529 = vmul.f32 %v1281, 1.442695
        %v1530 = vpow.pop %v1529
        %v1531 = vmul.f32 %v1286, 1.442695
        %v1532 = vpow.pop %v1531
        %v1533 = vmul.f32 %v1291, 1.442695
        %v1534 = vpow.pop %v1533
        %v1535 = vmul.f32 %v1296, 1.442695
        %v1536 = vpow.pop %v1535
        %v1537 = vmul.f32 %v1301, 1.442695
        %v1538 = vpow.pop %v1537
        %v1539 = vmul.f32 %v1306, 1.442695
        %v1540 = vpow.pop %v1539
        %v1541 = vmul.f32 %v1311, 1.442695
        %v1542 = vpow.pop %v1541
        %v1543 = vmul.f32 %v1316, 1.442695
        %v1544 = vpow.pop %v1543
        %v1545 = vmul.f32 %v1482, 32.0
        %v1546 = vmul.f32 %v1484, 32.0
        %v1547 = vmul.f32 %v1486, 32.0
        %v1548 = vmul.f32 %v1488, 32.0
        %v1549 = vmul.f32 %v1490, 32.0
        %v1550 = vmul.f32 %v1492, 32.0
        %v1551 = vmul.f32 %v1494, 32.0
        %v1552 = vmul.f32 %v1496, 32.0
        %v1553 = vmul.f32 %v1498, 32.0
        %v1554 = vmul.f32 %v1500, 32.0
        %v1555 = vmul.f32 %v1502, 32.0
        %v1556 = vmul.f32 %v1504, 32.0
        %v1557 = vmul.f32 %v1506, 32.0
        %v1558 = vmul.f32 %v1508, 32.0
        %v1559 = vmul.f32 %v1510, 32.0
        %v1560 = vmul.f32 %v1512, 32.0
        %v1561 = vmul.f32 %v1514, 32.0
        %v1562 = vmul.f32 %v1516, 32.0
        %v1563 = vmul.f32 %v1518, 32.0
        %v1564 = vmul.f32 %v1520, 32.0
        %v1565 = vmul.f32 %v1522, 32.0
        %v1566 = vmul.f32 %v1524, 32.0
        %v1567 = vmul.f32 %v1526, 32.0
        %v1568 = vmul.f32 %v1528, 32.0
        %v1569 = vmul.f32 %v1530, 32.0
        %v1570 = vmul.f32 %v1532, 32.0
        %v1571 = vmul.f32 %v1534, 32.0
        %v1572 = vmul.f32 %v1536, 32.0
        %v1573 = vmul.f32 %v1538, 32.0
        %v1574 = vmul.f32 %v1540, 32.0
        %v1575 = vmul.f32 %v1542, 32.0
        %v1576 = vmul.f32 %v1544, 32.0
        %v1577 = vmul.f32 %v1545, 0.5
        %v1578 = vmul.f32 %v1546, 0.5
        %v1579 = vmul.f32 %v1547, 0.5
        %v1580 = vmul.f32 %v1548, 0.5
        %v1581 = vmul.f32 %v1549, 0.5
        %v1582 = vmul.f32 %v1550, 0.5
        %v1583 = vmul.f32 %v1551, 0.5
        %v1584 = vmul.f32 %v1552, 0.5
        %v1585 = vmul.f32 %v1553, 0.5
        %v1586 = vmul.f32 %v1554, 0.5
        %v1587 = vmul.f32 %v1555, 0.5
        %v1588 = vmul.f32 %v1556, 0.5
        %v1589 = vmul.f32 %v1557, 0.5
        %v1590 = vmul.f32 %v1558, 0.5
        %v1591 = vmul.f32 %v1559, 0.5
        %v1592 = vmul.f32 %v1560, 0.5
        %v1593 = vmul.f32 %v1561, 0.5
        %v1594 = vmul.f32 %v1562, 0.5
        %v1595 = vmul.f32 %v1563, 0.5
        %v1596 = vmul.f32 %v1564, 0.5
        %v1597 = vmul.f32 %v1565, 0.5
        %v1598 = vmul.f32 %v1566, 0.5
        %v1599 = vmul.f32 %v1567, 0.5
        %v1600 = vmul.f32 %v1568, 0.5
        %v1601 = vmul.f32 %v1569, 0.5
        %v1602 = vmul.f32 %v1570, 0.5
        %v1603 = vmul.f32 %v1571, 0.5
        %v1604 = vmul.f32 %v1572, 0.5
        %v1605 = vmul.f32 %v1573, 0.5
        %v1606 = vmul.f32 %v1574, 0.5
        %v1607 = vmul.f32 %v1575, 0.5
        %v1608 = vmul.f32 %v1576, 0.5
        %1641 = vrot.lane.b32.xlu0 %v1577, 126
        %v1642 = vpop.permute.xlu0 %1641
        %1643 = vrot.lane.b32.xlu0 %v1578, 126
        %v1644 = vpop.permute.xlu0 %1643
        %1645 = vrot.lane.b32.xlu0 %v1579, 126
        %v1646 = vpop.permute.xlu0 %1645
        %1647 = vrot.lane.b32.xlu0 %v1580, 126
        %v1648 = vpop.permute.xlu0 %1647
        %1649 = vrot.lane.b32.xlu0 %v1581, 126
        %v1650 = vpop.permute.xlu0 %1649
        %1651 = vrot.lane.b32.xlu0 %v1582, 126
        %v1652 = vpop.permute.xlu0 %1651
        %1653 = vrot.lane.b32.xlu0 %v1583, 126
        %v1654 = vpop.permute.xlu0 %1653
        %1655 = vrot.lane.b32.xlu0 %v1584, 126
        %v1656 = vpop.permute.xlu0 %1655
        %1657 = vrot.lane.b32.xlu0 %v1585, 126
        %v1658 = vpop.permute.xlu0 %1657
        %1659 = vrot.lane.b32.xlu0 %v1586, 126
        %v1660 = vpop.permute.xlu0 %1659
        %1661 = vrot.lane.b32.xlu0 %v1587, 126
        %v1662 = vpop.permute.xlu0 %1661
        %1663 = vrot.lane.b32.xlu0 %v1588, 126
        %v1664 = vpop.permute.xlu0 %1663
        %1665 = vrot.lane.b32.xlu0 %v1589, 126
        %v1666 = vpop.permute.xlu0 %1665
        %1667 = vrot.lane.b32.xlu0 %v1590, 126
        %v1668 = vpop.permute.xlu0 %1667
        %1669 = vrot.lane.b32.xlu0 %v1591, 126
        %v1670 = vpop.permute.xlu0 %1669
        %1671 = vrot.lane.b32.xlu0 %v1592, 126
        %v1672 = vpop.permute.xlu0 %1671
        %1673 = vrot.lane.b32.xlu0 %v1593, 126
        %v1674 = vpop.permute.xlu0 %1673
        %1675 = vrot.lane.b32.xlu0 %v1594, 126
        %v1676 = vpop.permute.xlu0 %1675
        %1677 = vrot.lane.b32.xlu0 %v1595, 126
        %v1678 = vpop.permute.xlu0 %1677
        %1679 = vrot.lane.b32.xlu0 %v1596, 126
        %v1680 = vpop.permute.xlu0 %1679
        %1681 = vrot.lane.b32.xlu0 %v1597, 126
        %v1682 = vpop.permute.xlu0 %1681
        %1683 = vrot.lane.b32.xlu0 %v1598, 126
        %v1684 = vpop.permute.xlu0 %1683
        %1685 = vrot.lane.b32.xlu0 %v1599, 126
        %v1686 = vpop.permute.xlu0 %1685
        %1687 = vrot.lane.b32.xlu0 %v1600, 126
        %v1688 = vpop.permute.xlu0 %1687
        %1689 = vrot.lane.b32.xlu0 %v1601, 126
        %v1690 = vpop.permute.xlu0 %1689
        %1691 = vrot.lane.b32.xlu0 %v1602, 126
        %v1692 = vpop.permute.xlu0 %1691
        %1693 = vrot.lane.b32.xlu0 %v1603, 126
        %v1694 = vpop.permute.xlu0 %1693
        %1695 = vrot.lane.b32.xlu0 %v1604, 126
        %v1696 = vpop.permute.xlu0 %1695
        %1697 = vrot.lane.b32.xlu0 %v1605, 126
        %v1698 = vpop.permute.xlu0 %1697
        %1699 = vrot.lane.b32.xlu0 %v1606, 126
        %v1700 = vpop.permute.xlu0 %1699
        %1701 = vrot.lane.b32.xlu0 %v1607, 126
        %v1702 = vpop.permute.xlu0 %1701
        %1703 = vrot.lane.b32.xlu0 %v1608, 126
        %v1704 = vpop.permute.xlu0 %1703
        %v1737 = vsub.f32 %v1449, %v1642
        %v1738 = vsub.f32 %v1450, %v1644
        %v1739 = vsub.f32 %v1451, %v1646
        %v1740 = vsub.f32 %v1452, %v1648
        %v1741 = vsub.f32 %v1453, %v1650
        %v1742 = vsub.f32 %v1454, %v1652
        %v1743 = vsub.f32 %v1455, %v1654
        %v1744 = vsub.f32 %v1456, %v1656
        %v1745 = vsub.f32 %v1457, %v1658
        %v1746 = vsub.f32 %v1458, %v1660
        %v1747 = vsub.f32 %v1459, %v1662
        %v1748 = vsub.f32 %v1460, %v1664
        %v1749 = vsub.f32 %v1461, %v1666
        %v1750 = vsub.f32 %v1462, %v1668
        %v1751 = vsub.f32 %v1463, %v1670
        %v1752 = vsub.f32 %v1464, %v1672
        %v1753 = vsub.f32 %v1465, %v1674
        %v1754 = vsub.f32 %v1466, %v1676
        %v1755 = vsub.f32 %v1467, %v1678
        %v1756 = vsub.f32 %v1468, %v1680
        %v1757 = vsub.f32 %v1469, %v1682
        %v1758 = vsub.f32 %v1470, %v1684
        %v1759 = vsub.f32 %v1471, %v1686
        %v1760 = vsub.f32 %v1472, %v1688
        %v1761 = vsub.f32 %v1473, %v1690
        %v1762 = vsub.f32 %v1474, %v1692
        %v1763 = vsub.f32 %v1475, %v1694
        %v1764 = vsub.f32 %v1476, %v1696
        %v1765 = vsub.f32 %v1477, %v1698
        %v1766 = vsub.f32 %v1478, %v1700
        %v1767 = vsub.f32 %v1479, %v1702
        %v1768 = vsub.f32 %v1480, %v1704
        %v1769 = vadd.f32 %v1449, %v1642
        %v1770 = vadd.f32 %v1450, %v1644
        %v1771 = vadd.f32 %v1451, %v1646
        %v1772 = vadd.f32 %v1452, %v1648
        %v1773 = vadd.f32 %v1453, %v1650
        %v1774 = vadd.f32 %v1454, %v1652
        %v1775 = vadd.f32 %v1455, %v1654
        %v1776 = vadd.f32 %v1456, %v1656
        %v1777 = vadd.f32 %v1457, %v1658
        %v1778 = vadd.f32 %v1458, %v1660
        %v1779 = vadd.f32 %v1459, %v1662
        %v1780 = vadd.f32 %v1460, %v1664
        %v1781 = vadd.f32 %v1461, %v1666
        %v1782 = vadd.f32 %v1462, %v1668
        %v1783 = vadd.f32 %v1463, %v1670
        %v1784 = vadd.f32 %v1464, %v1672
        %v1785 = vadd.f32 %v1465, %v1674
        %v1786 = vadd.f32 %v1466, %v1676
        %v1787 = vadd.f32 %v1467, %v1678
        %v1788 = vadd.f32 %v1468, %v1680
        %v1789 = vadd.f32 %v1469, %v1682
        %v1790 = vadd.f32 %v1470, %v1684
        %v1791 = vadd.f32 %v1471, %v1686
        %v1792 = vadd.f32 %v1472, %v1688
        %v1793 = vadd.f32 %v1473, %v1690
        %v1794 = vadd.f32 %v1474, %v1692
        %v1795 = vadd.f32 %v1475, %v1694
        %v1796 = vadd.f32 %v1476, %v1696
        %v1797 = vadd.f32 %v1477, %v1698
        %v1798 = vadd.f32 %v1478, %v1700
        %v1799 = vadd.f32 %v1479, %v1702
        %v1800 = vadd.f32 %v1480, %v1704
        %1833 = vrot.lane.b32.xlu0 %v1769, 2
        %v1834 = vpop.permute.xlu0 %1833
        %1835 = vrot.lane.b32.xlu0 %v1770, 2
        %v1836 = vpop.permute.xlu0 %1835
        %1837 = vrot.lane.b32.xlu0 %v1771, 2
        %v1838 = vpop.permute.xlu0 %1837
        %1839 = vrot.lane.b32.xlu0 %v1772, 2
        %v1840 = vpop.permute.xlu0 %1839
        %1841 = vrot.lane.b32.xlu0 %v1773, 2
        %v1842 = vpop.permute.xlu0 %1841
        %1843 = vrot.lane.b32.xlu0 %v1774, 2
        %v1844 = vpop.permute.xlu0 %1843
        %1845 = vrot.lane.b32.xlu0 %v1775, 2
        %v1846 = vpop.permute.xlu0 %1845
        %1847 = vrot.lane.b32.xlu0 %v1776, 2
        %v1848 = vpop.permute.xlu0 %1847
        %1849 = vrot.lane.b32.xlu0 %v1777, 2
        %v1850 = vpop.permute.xlu0 %1849
        %1851 = vrot.lane.b32.xlu0 %v1778, 2
        %v1852 = vpop.permute.xlu0 %1851
        %1853 = vrot.lane.b32.xlu0 %v1779, 2
        %v1854 = vpop.permute.xlu0 %1853
        %1855 = vrot.lane.b32.xlu0 %v1780, 2
        %v1856 = vpop.permute.xlu0 %1855
        %1857 = vrot.lane.b32.xlu0 %v1781, 2
        %v1858 = vpop.permute.xlu0 %1857
        %1859 = vrot.lane.b32.xlu0 %v1782, 2
        %v1860 = vpop.permute.xlu0 %1859
        %1861 = vrot.lane.b32.xlu0 %v1783, 2
        %v1862 = vpop.permute.xlu0 %1861
        %1863 = vrot.lane.b32.xlu0 %v1784, 2
        %v1864 = vpop.permute.xlu0 %1863
        %1865 = vrot.lane.b32.xlu0 %v1785, 2
        %v1866 = vpop.permute.xlu0 %1865
        %1867 = vrot.lane.b32.xlu0 %v1786, 2
        %v1868 = vpop.permute.xlu0 %1867
        %1869 = vrot.lane.b32.xlu0 %v1787, 2
        %v1870 = vpop.permute.xlu0 %1869
        %1871 = vrot.lane.b32.xlu0 %v1788, 2
        %v1872 = vpop.permute.xlu0 %1871
        %1873 = vrot.lane.b32.xlu0 %v1789, 2
        %v1874 = vpop.permute.xlu0 %1873
        %1875 = vrot.lane.b32.xlu0 %v1790, 2
        %v1876 = vpop.permute.xlu0 %1875
        %1877 = vrot.lane.b32.xlu0 %v1791, 2
        %v1878 = vpop.permute.xlu0 %1877
        %1879 = vrot.lane.b32.xlu0 %v1792, 2
        %v1880 = vpop.permute.xlu0 %1879
        %1881 = vrot.lane.b32.xlu0 %v1793, 2
        %v1882 = vpop.permute.xlu0 %1881
        %1883 = vrot.lane.b32.xlu0 %v1794, 2
        %v1884 = vpop.permute.xlu0 %1883
        %1885 = vrot.lane.b32.xlu0 %v1795, 2
        %v1886 = vpop.permute.xlu0 %1885
        %1887 = vrot.lane.b32.xlu0 %v1796, 2
        %v1888 = vpop.permute.xlu0 %1887
        %1889 = vrot.lane.b32.xlu0 %v1797, 2
        %v1890 = vpop.permute.xlu0 %1889
        %1891 = vrot.lane.b32.xlu0 %v1798, 2
        %v1892 = vpop.permute.xlu0 %1891
        %1893 = vrot.lane.b32.xlu0 %v1799, 2
        %v1894 = vpop.permute.xlu0 %1893
        %1895 = vrot.lane.b32.xlu0 %v1800, 2
        %v1896 = vpop.permute.xlu0 %1895
        %vm1929 = vcmask 15360
        %v1930 = vsel %vm1929, %v1737, %v1834
        %v1931 = vsel %vm1929, %v1738, %v1836
        %v1932 = vsel %vm1929, %v1739, %v1838
        %v1933 = vsel %vm1929, %v1740, %v1840
        %v1934 = vsel %vm1929, %v1741, %v1842
        %v1935 = vsel %vm1929, %v1742, %v1844
        %v1936 = vsel %vm1929, %v1743, %v1846
        %v1937 = vsel %vm1929, %v1744, %v1848
        %v1938 = vsel %vm1929, %v1745, %v1850
        %v1939 = vsel %vm1929, %v1746, %v1852
        %v1940 = vsel %vm1929, %v1747, %v1854
        %v1941 = vsel %vm1929, %v1748, %v1856
        %v1942 = vsel %vm1929, %v1749, %v1858
        %v1943 = vsel %vm1929, %v1750, %v1860
        %v1944 = vsel %vm1929, %v1751, %v1862
        %v1945 = vsel %vm1929, %v1752, %v1864
        %v1946 = vsel %vm1929, %v1753, %v1866
        %v1947 = vsel %vm1929, %v1754, %v1868
        %v1948 = vsel %vm1929, %v1755, %v1870
        %v1949 = vsel %vm1929, %v1756, %v1872
        %v1950 = vsel %vm1929, %v1757, %v1874
        %v1951 = vsel %vm1929, %v1758, %v1876
        %v1952 = vsel %vm1929, %v1759, %v1878
        %v1953 = vsel %vm1929, %v1760, %v1880
        %v1954 = vsel %vm1929, %v1761, %v1882
        %v1955 = vsel %vm1929, %v1762, %v1884
        %v1956 = vsel %vm1929, %v1763, %v1886
        %v1957 = vsel %vm1929, %v1764, %v1888
        %v1958 = vsel %vm1929, %v1765, %v1890
        %v1959 = vsel %vm1929, %v1766, %v1892
        %v1960 = vsel %vm1929, %v1767, %v1894
        %v1961 = vsel %vm1929, %v1768, %v1896
        %1962 = vst.msk [vmem:[%s484] sm:$0xff] %vm1352, %v1930
        %1963 = vst.msk [vmem:[%s484 + $0x8] sm:$0xff] %vm1352, %v1931
        %1964 = vst.msk [vmem:[%s484 + $0x10] sm:$0xff] %vm1352, %v1932
        %1965 = vst.msk [vmem:[%s484 + $0x18] sm:$0xff] %vm1352, %v1933
        %1966 = vst.msk [vmem:[%s484 + $0x20] sm:$0xff] %vm1352, %v1934
        %1967 = vst.msk [vmem:[%s484 + $0x28] sm:$0xff] %vm1352, %v1935
        %1968 = vst.msk [vmem:[%s484 + $0x30] sm:$0xff] %vm1352, %v1936
        %1969 = vst.msk [vmem:[%s484 + $0x38] sm:$0xff] %vm1352, %v1937
        %1970 = vst.msk [vmem:[%s484 + $0x40] sm:$0xff] %vm1352, %v1938
        %1971 = vst.msk [vmem:[%s484 + $0x48] sm:$0xff] %vm1352, %v1939
        %1972 = vst.msk [vmem:[%s484 + $0x50] sm:$0xff] %vm1352, %v1940
        %1973 = vst.msk [vmem:[%s484 + $0x58] sm:$0xff] %vm1352, %v1941
        %1974 = vst.msk [vmem:[%s484 + $0x60] sm:$0xff] %vm1352, %v1942
        %1975 = vst.msk [vmem:[%s484 + $0x68] sm:$0xff] %vm1352, %v1943
        %1976 = vst.msk [vmem:[%s484 + $0x70] sm:$0xff] %vm1352, %v1944
        %1977 = vst.msk [vmem:[%s484 + $0x78] sm:$0xff] %vm1352, %v1945
        %1978 = vst.msk [vmem:[%s484 + $0x80] sm:$0xff] %vm1352, %v1946
        %1979 = vst.msk [vmem:[%s484 + $0x88] sm:$0xff] %vm1352, %v1947
        %1980 = vst.msk [vmem:[%s484 + $0x90] sm:$0xff] %vm1352, %v1948
        %1981 = vst.msk [vmem:[%s484 + $0x98] sm:$0xff] %vm1352, %v1949
        %1982 = vst.msk [vmem:[%s484 + $0xa0] sm:$0xff] %vm1352, %v1950
        %1983 = vst.msk [vmem:[%s484 + $0xa8] sm:$0xff] %vm1352, %v1951
        %1984 = vst.msk [vmem:[%s484 + $0xb0] sm:$0xff] %vm1352, %v1952
        %1985 = vst.msk [vmem:[%s484 + $0xb8] sm:$0xff] %vm1352, %v1953
        %1986 = vst.msk [vmem:[%s484 + $0xc0] sm:$0xff] %vm1352, %v1954
        %1987 = vst.msk [vmem:[%s484 + $0xc8] sm:$0xff] %vm1352, %v1955
        %1988 = vst.msk [vmem:[%s484 + $0xd0] sm:$0xff] %vm1352, %v1956
        %1989 = vst.msk [vmem:[%s484 + $0xd8] sm:$0xff] %vm1352, %v1957
        %1990 = vst.msk [vmem:[%s484 + $0xe0] sm:$0xff] %vm1352, %v1958
        %1991 = vst.msk [vmem:[%s484 + $0xe8] sm:$0xff] %vm1352, %v1959
        %1992 = vst.msk [vmem:[%s484 + $0xf0] sm:$0xff] %vm1352, %v1960
        %1993 = vst.msk [vmem:[%s484 + $0xf8] sm:$0xff] %vm1352, %v1961
        %s1994 = smul.u32 32, %s29
        %p1995 = scmp.lt.s32.totalorder %s28, 1
        %s1996 = scalar_select %p1995, %s28, 1
        %p1997 = scmp.lt.s32.totalorder %s1994, 31
        %s1998 = scalar_select %p1997, %s1994, 31
        %s1999 = smul.addr %s1996, 32
        %s2000 = sadd.s32 %s1998, %s1999
        %s2001 = smul.addr %s2000, 8
        %s2002 = scalar_lea.vmem %s7, %s2001
        %s2003 = smul.u32 32, %s29
        %p2004 = scmp.lt.s32.totalorder %s28, 1
        %s2005 = scalar_select %p2004, %s28, 1
        %p2006 = scmp.lt.s32.totalorder %s2003, 31
        %s2007 = scalar_select %p2006, %s2003, 31
        %s2008 = smul.addr %s2005, 32
        %s2009 = sadd.s32 %s2007, %s2008
        %s2010 = smul.addr %s2009, 8
        %s2011 = scalar_lea.vmem %s8, %s2010
        %s2012 = smul.u32 32, %s29
        %p2013 = scmp.lt.s32.totalorder %s28, 1
        %s2014 = scalar_select %p2013, %s28, 1
        %p2015 = scmp.lt.s32.totalorder %s2012, 31
        %s2016 = scalar_select %p2015, %s2012, 31
        %s2017 = smul.addr %s2014, 32
        %s2018 = sadd.s32 %s2016, %s2017
        %s2019 = smul.addr %s2018, 8
        %s2020 = scalar_lea.vmem %s9, %s2019
        // Predicated region
        $region53: #{tpu_custom_call.1} parent=47 // pred_check
          %p2021 = pneg %p222
        $region54: #{tpu_custom_call.1} parent=47 // pred_check_branch
          %2023 = sbr.rel (%p2021) target = $region56
        $region55: #{tpu_custom_call.1} parent=47 // pred_region
          %s2024 = smul.u32 32, %s29
        $region56: #{tpu_custom_call.1} parent=47 // pred_fallthru
          _
        // Predicated region
        $region57: #{tpu_custom_call.1} parent=47 // pred_check
          %p2025 = pneg %p250
        $region58: #{tpu_custom_call.1} parent=47 // pred_check_branch
          %2027 = sbr.rel (%p2025) target = $region60
        $region59: #{tpu_custom_call.1} parent=47 // pred_region
          %s2028 = smul.u32 32, %s29
        $region60: #{tpu_custom_call.1} parent=47 // pred_fallthru
          _
        // Predicated region
        $region61: #{tpu_custom_call.1} parent=47 // pred_check
          %p2029 = pneg %p278
        $region62: #{tpu_custom_call.1} parent=47 // pred_check_branch
          %2031 = sbr.rel (%p2029) target = $region64
        $region63: #{tpu_custom_call.1} parent=47 // pred_region
          %s2032 = smul.u32 32, %s29
        $region64: #{tpu_custom_call.1} parent=47 // pred_fallthru
          _
      $region48: #{tpu_custom_call.1} parent=5 // pred_fallthru
        _
      %p2033 = scmp.le.s32.totalorder 2, %s19
      // Predicated region
      $region65: #{tpu_custom_call.1} parent=5 // pred_check
        %p2034 = pneg %p2033
      $region66: #{tpu_custom_call.1} parent=5 // pred_check_branch
        %2036 = sbr.rel (%p2034) target = $region68
      $region67: #{tpu_custom_call.1} parent=5 // pred_region
        %s2037 = ssub.s32 %s19, 2
        // Predicated region
        $region69: #{tpu_custom_call.1} parent=67 // pred_check
          %p2038 = pneg %p228
        $region70: #{tpu_custom_call.1} parent=67 // pred_check_branch
          %2040 = sbr.rel (%p2038) target = $region72
        $region71: #{tpu_custom_call.1} parent=67 // pred_region
          %s2041 = smul.u32 32, %s31
          %p2042 = scmp.lt.s32.totalorder %s30, 1
          %s2043 = scalar_select %p2042, %s30, 1
          %p2044 = scmp.lt.s32.totalorder %s2041, 31
          %s2045 = scalar_select %p2044, %s2041, 31
          %s2046 = smul.addr %s2043, 32
          %s2047 = sadd.s32 %s2045, %s2046
          %s2048 = smul.addr %s2047, 8
          %s2049 = scalar_lea.vmem %s7, %s2048
        $region72: #{tpu_custom_call.1} parent=67 // pred_fallthru
          _
        // Predicated region
        $region73: #{tpu_custom_call.1} parent=67 // pred_check
          %p2050 = pneg %p256
        $region74: #{tpu_custom_call.1} parent=67 // pred_check_branch
          %2052 = sbr.rel (%p2050) target = $region76
        $region75: #{tpu_custom_call.1} parent=67 // pred_region
          %s2053 = smul.u32 32, %s31
          %p2054 = scmp.lt.s32.totalorder %s30, 1
          %s2055 = scalar_select %p2054, %s30, 1
          %p2056 = scmp.lt.s32.totalorder %s2053, 31
          %s2057 = scalar_select %p2056, %s2053, 31
          %s2058 = smul.addr %s2055, 32
          %s2059 = sadd.s32 %s2057, %s2058
          %s2060 = smul.addr %s2059, 8
          %s2061 = scalar_lea.vmem %s8, %s2060
        $region76: #{tpu_custom_call.1} parent=67 // pred_fallthru
          _
        // Predicated region
        $region77: #{tpu_custom_call.1} parent=67 // pred_check
          %p2062 = pneg %p284
        $region78: #{tpu_custom_call.1} parent=67 // pred_check_branch
          %2064 = sbr.rel (%p2062) target = $region80
        $region79: #{tpu_custom_call.1} parent=67 // pred_region
          %s2065 = smul.u32 32, %s31
          %p2066 = scmp.lt.s32.totalorder %s30, 1
          %s2067 = scalar_select %p2066, %s30, 1
          %p2068 = scmp.lt.s32.totalorder %s2065, 31
          %s2069 = scalar_select %p2068, %s2065, 31
          %s2070 = smul.addr %s2067, 32
          %s2071 = sadd.s32 %s2069, %s2070
          %s2072 = smul.addr %s2071, 8
          %s2073 = scalar_lea.vmem %s9, %s2072
        $region80: #{tpu_custom_call.1} parent=67 // pred_fallthru
          _
      $region68: #{tpu_custom_call.1} parent=5 // pred_fallthru
        _
    $region6: #{tpu_custom_call.1} parent=1 // loop_footer
      %s23 = sadd.s32 1, %s19
    $region7: #{tpu_custom_call.1} parent=1 // loop_footer_branch
      %18 = sbr.rel target = $region3
    $region8: #{tpu_custom_call.1} parent=1 // loop_exit
      _
    %2074 = vsyncpa [#allocation3], 1
    %s2075 = scalar_lea.sflag [#allocation3], 1
    %2076 = vsyncpa %s2075, 1

</llo_original>
